<compile_context>
chip_gen: v7x
topology: tpu7x:2x2x1
jax: 0.10.0
libtpu: 0.0.40
codegen_flags: <defaults>
</compile_context>

<pallas_src>
import jax
import jax.numpy as jnp
from jax.experimental import pallas as pl
from jax.experimental.pallas import tpu as pltpu


# ----------------------------------------------------------------------------
# Helpers
# ----------------------------------------------------------------------------
def _round_up(x, m):
    return ((x + m - 1) // m) * m


def _choose_point_tile(bs, target=2048):
    """Lane tile (# sampled points per block): multiple of 128, or == padded BS if small.
    Caps the tile so the parallel point axis has >= 2 blocks when possible (dual-TC v7x)."""
    bs128 = _round_up(bs, 128)
    if bs128 >= 256:
        target = min(target, (bs128 // 2) // 128 * 128)
    if bs128 <= target:
        return bs128
    best, best_pad = target, _round_up(bs, target) - bs
    cand = target - 128
    while cand >= 128:
        pad = _round_up(bs, cand) - bs
        if pad < best_pad:
            best, best_pad = cand, pad
        if pad == 0:
            break
        cand -= 128
    return best


def _choose_k_block(k):
    """Neighbours processed per grid step: largest divisor of K that is <= 4."""
    for c in (4, 3, 2):
        if k % c == 0:
            return c
    return 1


# ----------------------------------------------------------------------------
# Fused Pallas kernel: full MLP stack (1x1 conv, BN-scale folded, +shift, ReLU) + max over K
# ----------------------------------------------------------------------------
def _make_fused_mlp_max_kernel(num_layers, kblk):
    def kernel(x_ref, *refs):
        params = refs[: 2 * num_layers]
        grouped_ref = refs[2 * num_layers]      # (Kblk, C_last, TBS) bf16
        pooled_ref = refs[2 * num_layers + 1]   # (C_last, TBS)       f32, resident over K blocks

        kb = pl.program_id(1)

        # Hoist parameter loads out of the Kblk loop (weights stay in vregs/VMEM).
        ws = [params[2 * j][...] for j in range(num_layers)]         # (Cout, Cin) bf16
        shifts = [params[2 * j + 1][...] for j in range(num_layers)]  # (Cout, 1)   f32

        local_max = None
        for kk in range(kblk):                  # Kblk neighbours per grid step (unrolled)
            h = x_ref[kk]                       # (Cin, TBS) bf16
            y = None
            for j in range(num_layers):         # layer stack unrolled; intermediates stay in VMEM
                y = jnp.dot(ws[j], h, preferred_element_type=jnp.float32)   # MXU, f32 acc
                y = jnp.maximum(y + shifts[j], 0.0)                          # shift + ReLU
                if j + 1 < num_layers:
                    h = y.astype(jnp.bfloat16)
            grouped_ref[kk] = y.astype(jnp.bfloat16)   # bf16, lane-dense unmasked store
            local_max = y if local_max is None else jnp.maximum(local_max, y)

        @pl.when(kb == 0)
        def _():
            pooled_ref[...] = local_max         # init running max on first K block

        @pl.when(kb != 0)
        def _():
            pooled_ref[...] = jnp.maximum(pooled_ref[...], local_max)

    return kernel


def fused_mlp_max(grouped_feat, params, *, target_points_per_block=2048):
    """grouped_feat: [B, S, K, Cin_raw] (any float dtype; cast to bf16 internally).
    params: list of (W[Cout,Cin] bf16 with BN scale folded, shift[Cout,1] f32);
    the first layer's Cin may be zero-padded (>= Cin_raw) for sublane packing.
    Returns (grouped [B, C_last, K, S] bf16, pooled [B, C_last, S] f32), NCHW convention."""
    B, S, K, Cin_raw = grouped_feat.shape
    BS = B * S
    TBS = _choose_point_tile(BS, target_points_per_block)
    BS_pad = _round_up(BS, TBS)
    num_layers = len(params)
    C_last = params[-1][0].shape[0]
    Cin_pad = params[0][0].shape[1]
    Kblk = _choose_k_block(K)

    # bf16 BEFORE layout shuffles; zero-pad channel dim to the padded first-layer width.
    x = grouped_feat.astype(jnp.bfloat16)
    if Cin_pad != Cin_raw:
        x = jnp.pad(x, ((0, 0), (0, 0), (0, 0), (0, Cin_pad - Cin_raw)))
    # channels-first, K-major, lane-dense: [K, Cin_pad, BS_pad]
    x = jnp.transpose(x.reshape(BS, K, Cin_pad), (1, 2, 0))
    if BS_pad != BS:
        x = jnp.pad(x, ((0, 0), (0, 0), (0, BS_pad - BS)))

    in_specs = [pl.BlockSpec((Kblk, Cin_pad, TBS), lambda i, kb: (kb, 0, i))]
    args = [x]
    for (w, shift) in params:
        co, ci = w.shape
        in_specs.append(pl.BlockSpec((co, ci), lambda i, kb: (0, 0)))   # resident weights
        in_specs.append(pl.BlockSpec((co, 1), lambda i, kb: (0, 0)))
        args.extend([w, shift])

    flops = 2 * BS_pad * K * sum(int(w.shape[0] * w.shape[1]) for (w, _) in params)
    bytes_accessed = (int(x.size) * 2 + K * C_last * BS_pad * 2 + C_last * BS_pad * 4
                      + sum(int(w.size) * 2 + int(s.size) * 4 for (w, s) in params))

    grouped_t, pooled_t = pl.pallas_call(
        _make_fused_mlp_max_kernel(num_layers, Kblk),
        grid=(BS_pad // TBS, K // Kblk),
        in_specs=in_specs,
        out_specs=(
            pl.BlockSpec((Kblk, C_last, TBS), lambda i, kb: (kb, 0, i)),
            pl.BlockSpec((C_last, TBS), lambda i, kb: (0, i)),   # resident across K blocks
        ),
        out_shape=(
            jax.ShapeDtypeStruct((K, C_last, BS_pad), jnp.bfloat16),
            jax.ShapeDtypeStruct((C_last, BS_pad), jnp.float32),
        ),
        compiler_params=pltpu.CompilerParams(
            dimension_semantics=("parallel", "arbitrary")),
        cost_estimate=pl.CostEstimate(flops=int(flops), transcendentals=0,
                                      bytes_accessed=int(bytes_accessed)),
    )(*args)

    grouped = grouped_t[:, :, :BS].reshape(K, C_last, B, S)
    grouped = jnp.transpose(grouped, (2, 1, 0, 3))            # [B, C_last, K, S] bf16
    pooled = pooled_t[:, :BS].reshape(C_last, B, S)
    pooled = jnp.transpose(pooled, (1, 0, 2))                 # [B, C_last, S] f32
    return grouped, pooled


# ----------------------------------------------------------------------------
# Glue: FPS / grouping (sequential, data-dependent gathers -> plain JAX)
# ----------------------------------------------------------------------------
def farthest_point_sample(xyz, npoint):
    """xyz: [B, N, 3] -> indices [B, npoint]."""
    # TODO(synk): torch version seeds the loop with torch.randint; we use a fixed start index.
    B, N, _ = xyz.shape

    def body(i, state):
        centroids, distance, farthest = state
        centroids = centroids.at[:, i].set(farthest)
        centroid = jax.vmap(lambda p, f: p[f])(xyz, farthest)[:, None, :]   # [B,1,3]
        dist = jnp.sum((xyz - centroid) ** 2, axis=-1)                      # [B,N]
        distance = jnp.minimum(distance, dist)
        farthest = jnp.argmax(distance, axis=-1).astype(jnp.int32)
        return centroids, distance, farthest

    centroids = jnp.zeros((B, npoint), dtype=jnp.int32)
    distance = jnp.full((B, N), 1e10, dtype=jnp.float32)
    farthest = jnp.zeros((B,), dtype=jnp.int32)
    centroids, _, _ = jax.lax.fori_loop(0, npoint, body, (centroids, distance, farthest))
    return centroids


def index_points(points, idx):
    """points: [B, N, C], idx: [B, ...] -> [B, ..., C]."""
    return jax.vmap(lambda p, i: p[i])(points, idx)


def square_distance(src, dst):
    dist = -2.0 * jnp.matmul(src, jnp.swapaxes(dst, 1, 2))
    dist = dist + jnp.sum(src ** 2, axis=-1)[..., None]
    dist = dist + jnp.sum(dst ** 2, axis=-1)[:, None, :]
    return dist


def query_ball_point(radius, nsample, xyz, new_xyz):
    B, N, _ = xyz.shape
    S = new_xyz.shape[1]
    group_idx = jnp.broadcast_to(jnp.arange(N, dtype=jnp.int32), (B, S, N))
    sqrdists = square_distance(new_xyz, xyz)
    group_idx = jnp.where(sqrdists > radius ** 2, N, group_idx)
    group_idx = jnp.sort(group_idx, axis=-1)[:, :, :nsample]
    group_first = jnp.broadcast_to(group_idx[:, :, 0:1], (B, S, nsample))
    group_idx = jnp.where(group_idx == N, group_first, group_idx)
    return group_idx


# ----------------------------------------------------------------------------
# The module
# ----------------------------------------------------------------------------
class PointNetSetAbstractionMsgPallas:
    def __init__(self, npoint, radius_list, nsample_list, in_channel, mlp_list, key):
        self.npoint = npoint
        self.radius_list = list(radius_list)
        self.nsample_list = list(nsample_list)
        eps = 1e-5
        cin0_raw = 2 * in_channel + 3
        cin0_pad = _round_up(cin0_raw, 16)       # bf16 sublane packing
        # per scale: list of (W[Cout,Cin] bf16 with BN scale folded, shift[Cout,1] f32)
        # (conv bias + eval-mode BN folded once at init, in f32, single bf16 cast)
        self.params = []
        for mlps in mlp_list:
            last = cin0_raw
            layers = []
            for li, out_ch in enumerate(mlps):
                key, kw, kb, kg, kbe, km, kv = jax.random.split(key, 7)
                W = 0.1 * jax.random.normal(kw, (out_ch, last), jnp.float32)   # conv wt [Cout,Cin]
                b = 0.01 * jax.random.normal(kb, (out_ch,), jnp.float32)
                gamma = 1.0 + 0.1 * jax.random.normal(kg, (out_ch,), jnp.float32)
                beta = 0.05 * jax.random.normal(kbe, (out_ch,), jnp.float32)
                r_mean = 0.01 * jax.random.normal(km, (out_ch,), jnp.float32)
                r_var = 1.0 + 0.1 * jax.random.uniform(kv, (out_ch,), jnp.float32)
                scale = gamma / jnp.sqrt(r_var + eps)
                shift = (b - r_mean) * scale + beta
                Wf = W * scale[:, None]                         # fold BN scale into weights (f32)
                if li == 0 and cin0_pad != cin0_raw:            # zero-pad input channels
                    Wf = jnp.pad(Wf, ((0, 0), (0, cin0_pad - cin0_raw)))
                layers.append((Wf.astype(jnp.bfloat16),
                               shift.reshape(out_ch, 1).astype(jnp.float32)))
                last = out_ch
            self.params.append(layers)

    def __call__(self, xyz, points):
        """xyz: [B, 3, N], points: [B, D, N]  (PyTorch channel-first inputs)."""
        xyz_t = jnp.transpose(xyz, (0, 2, 1))          # [B, N, 3]
        points_t = jnp.transpose(points, (0, 2, 1))    # [B, N, D]
        B, N, _ = xyz_t.shape
        D = points_t.shape[2]
        S = self.npoint

        fps_idx = farthest_point_sample(xyz_t, S)          # [B, S]
        new_xyz = index_points(xyz_t, fps_idx)             # [B, S, 3]
        new_points_ori = index_points(points_t, fps_idx)   # [B, S, D]

        new_points_list = []
        grouped_points_list = []
        for i, radius in enumerate(self.radius_list):
            K = self.nsample_list[i]
            group_idx = query_ball_point(radius, K, xyz_t, new_xyz)           # [B, S, K]
            grouped_xyz = (index_points(xyz_t, group_idx)
                           - new_xyz[:, :, None, :]) / radius                 # [B, S, K, 3]
            grouped_points = index_points(points_t, group_idx)                # [B, S, K, D]
            ori_K = jnp.broadcast_to(new_points_ori[:, :, None, :], (B, S, K, D))
            # matches the reference: cat([grouped_points - ori, ori, grouped_xyz/r], -1)
            # cast to bf16 BEFORE the concat / layout transpose (halves the HBM glue traffic)
            grouped_feat = jnp.concatenate(
                [(grouped_points - ori_K).astype(jnp.bfloat16),
                 ori_K.astype(jnp.bfloat16),
                 grouped_xyz.astype(jnp.bfloat16)], axis=-1)                  # [B, S, K, 2D+3] bf16

            grouped, pooled = fused_mlp_max(grouped_feat, self.params[i])
            grouped_points_list.append(grouped)     # [B, C_last, K, S] bf16
            new_points_list.append(pooled)          # [B, C_last, S]   f32

        new_xyz_out = jnp.transpose(new_xyz, (0, 2, 1))               # [B, 3, S]
        new_points_concat = jnp.concatenate(new_points_list, axis=1)  # [B, sum(C_last), S]
        return new_xyz_out, new_points_concat, grouped_points_list


# ----------------------------------------------------------------------------
# Demo
# ----------------------------------------------------------------------------
if __name__ == "__main__":
    key = jax.random.PRNGKey(0)
    k_xyz, k_pts, k_par = jax.random.split(key, 3)

    B, N, D = 2, 16, 4          # batch, num points, feature channels
    npoint = 8
    radius_list = [0.4, 0.8]
    nsample_list = [4, 8]
    mlp_list = [[16, 32], [16, 32]]

    xyz = jax.random.uniform(k_xyz, (B, 3, N), jnp.float32)           # [B, 3, N]
    points = jax.random.normal(k_pts, (B, D, N), jnp.float32)         # [B, D, N]

    module = PointNetSetAbstractionMsgPallas(
        npoint, radius_list, nsample_list, D, mlp_list, k_par)

    fwd = jax.jit(module.__call__)
    new_xyz, new_points_concat, grouped_list = fwd(xyz, points)
    jax.block_until_ready((new_xyz, new_points_concat, grouped_list))

    assert new_xyz.shape == (B, 3, npoint)
    assert new_points_concat.shape == (B, sum(m[-1] for m in mlp_list), npoint)
    assert grouped_list[0].shape == (B, mlp_list[0][-1], nsample_list[0], npoint)
    assert grouped_list[1].shape == (B, mlp_list[1][-1], nsample_list[1], npoint)
    assert bool(jnp.all(jnp.isfinite(new_points_concat)))
    # internal consistency: in-kernel running max (f32) vs max over the bf16 grouped output
    c0 = mlp_list[0][-1]
    ref_max = jnp.max(grouped_list[0].astype(jnp.float32), axis=2)
    assert bool(jnp.allclose(new_points_concat[:, :c0, :], ref_max, rtol=1e-2, atol=1e-2))
    print("KERNEL_OK")
</pallas_src>

<mosaic_0001>
module attributes {stable_mosaic.version = 11 : i64} {
  func.func @kernel(%arg0: i32, %arg1: i32, %arg2: memref<4x16x128xbf16, #tpu.memory_space<vmem>>, %arg3: memref<16x16xbf16, #tpu.memory_space<vmem>>, %arg4: memref<16x1xf32, #tpu.memory_space<vmem>>, %arg5: memref<32x16xbf16, #tpu.memory_space<vmem>>, %arg6: memref<32x1xf32, #tpu.memory_space<vmem>>, %arg7: memref<4x32x128xbf16, #tpu.memory_space<vmem>>, %arg8: memref<32x128xf32, #tpu.memory_space<vmem>>) attributes {dimension_semantics = [#tpu.dimension_semantics<parallel>, #tpu.dimension_semantics<arbitrary>], iteration_bounds = array<i64: 1, 1>, scalar_prefetch = 0 : i64, scratch_operands = 0 : i64, tpu.core_type = #tpu.core_type<tc>, window_params = [{transform_indices = @transform_0, window_bounds = array<i64: 4, 16, 128>}, {pipeline_mode = #tpu.pipeline_mode<synchronous>, transform_indices = @transform_1, window_bounds = array<i64: 16, 16>}, {pipeline_mode = #tpu.pipeline_mode<synchronous>, transform_indices = @transform_2, window_bounds = array<i64: 16, 1>}, {pipeline_mode = #tpu.pipeline_mode<synchronous>, transform_indices = @transform_3, window_bounds = array<i64: 32, 16>}, {pipeline_mode = #tpu.pipeline_mode<synchronous>, transform_indices = @transform_4, window_bounds = array<i64: 32, 1>}, {transform_indices = @transform_5, window_bounds = array<i64: 4, 32, 128>}, {transform_indices = @transform_6, window_bounds = array<i64: 32, 128>}]} {
    %c0 = arith.constant 0 : index
    %c0_0 = arith.constant 0 : index
    %0 = vector.load %arg3[%c0, %c0_0] : memref<16x16xbf16, #tpu.memory_space<vmem>>, vector<16x16xbf16>
    %c0_1 = arith.constant 0 : index
    %c0_2 = arith.constant 0 : index
    %1 = vector.load %arg5[%c0_1, %c0_2] : memref<32x16xbf16, #tpu.memory_space<vmem>>, vector<32x16xbf16>
    %c0_3 = arith.constant 0 : index
    %c0_4 = arith.constant 0 : index
    %2 = vector.load %arg4[%c0_3, %c0_4] : memref<16x1xf32, #tpu.memory_space<vmem>>, vector<16x1xf32>
    %c0_5 = arith.constant 0 : index
    %c0_6 = arith.constant 0 : index
    %3 = vector.load %arg6[%c0_5, %c0_6] : memref<32x1xf32, #tpu.memory_space<vmem>>, vector<32x1xf32>
    %c0_7 = arith.constant 0 : index
    %c0_8 = arith.constant 0 : index
    %c0_9 = arith.constant 0 : index
    %4 = vector.load %arg2[%c0_7, %c0_8, %c0_9] : memref<4x16x128xbf16, #tpu.memory_space<vmem>>, vector<1x16x128xbf16>
    %5 = vector.shape_cast %4 : vector<1x16x128xbf16> to vector<16x128xbf16>
    %cst = arith.constant dense<0.000000e+00> : vector<16x128xf32>
    %6 = tpu.matmul %0, %5, %cst {dimension_numbers = #tpu.dot_dimension_numbers<[1], [0], [0], [1], [0, 0, 1, 1], [], []>} : vector<16x16xbf16>, vector<16x128xbf16>, vector<16x128xf32> -> vector<16x128xf32>
    %7 = vector.broadcast %2 : vector<16x1xf32> to vector<16x128xf32>
    %8 = arith.addf %6, %7 : vector<16x128xf32>
    %cst_10 = arith.constant 0.000000e+00 : f32
    %9 = vector.broadcast %cst_10 : f32 to vector<16x128xf32>
    %10 = arith.maximumf %8, %9 : vector<16x128xf32>
    %11 = arith.truncf %10 : vector<16x128xf32> to vector<16x128xbf16>
    %cst_11 = arith.constant dense<0.000000e+00> : vector<32x128xf32>
    %12 = tpu.matmul %1, %11, %cst_11 {dimension_numbers = #tpu.dot_dimension_numbers<[1], [0], [0], [1], [0, 0, 1, 1], [], []>} : vector<32x16xbf16>, vector<16x128xbf16>, vector<32x128xf32> -> vector<32x128xf32>
    %13 = vector.broadcast %3 : vector<32x1xf32> to vector<32x128xf32>
    %14 = arith.addf %12, %13 : vector<32x128xf32>
    %cst_12 = arith.constant 0.000000e+00 : f32
    %15 = vector.broadcast %cst_12 : f32 to vector<32x128xf32>
    %16 = arith.maximumf %14, %15 : vector<32x128xf32>
    %17 = arith.truncf %16 : vector<32x128xf32> to vector<32x128xbf16>
    %c0_13 = arith.constant 0 : index
    %c0_14 = arith.constant 0 : index
    %c0_15 = arith.constant 0 : index
    %18 = vector.load %arg7[%c0_13, %c0_14, %c0_15] : memref<4x32x128xbf16, #tpu.memory_space<vmem>>, vector<1x32x128xbf16>
    %19 = vector.shape_cast %18 : vector<1x32x128xbf16> to vector<32x128xbf16>
    %20 = vector.shape_cast %17 : vector<32x128xbf16> to vector<1x32x128xbf16>
    tpu.vector_store %arg7[%c0_13, %c0_14, %c0_15], %20 {strides = array<i32>} : memref<4x32x128xbf16, #tpu.memory_space<vmem>>, vector<1x32x128xbf16>,
    %c1 = arith.constant 1 : index
    %c0_16 = arith.constant 0 : index
    %c0_17 = arith.constant 0 : index
    %21 = vector.load %arg2[%c1, %c0_16, %c0_17] : memref<4x16x128xbf16, #tpu.memory_space<vmem>>, vector<1x16x128xbf16>
    %22 = vector.shape_cast %21 : vector<1x16x128xbf16> to vector<16x128xbf16>
    %cst_18 = arith.constant dense<0.000000e+00> : vector<16x128xf32>
    %23 = tpu.matmul %0, %22, %cst_18 {dimension_numbers = #tpu.dot_dimension_numbers<[1], [0], [0], [1], [0, 0, 1, 1], [], []>} : vector<16x16xbf16>, vector<16x128xbf16>, vector<16x128xf32> -> vector<16x128xf32>
    %24 = vector.broadcast %2 : vector<16x1xf32> to vector<16x128xf32>
    %25 = arith.addf %23, %24 : vector<16x128xf32>
    %cst_19 = arith.constant 0.000000e+00 : f32
    %26 = vector.broadcast %cst_19 : f32 to vector<16x128xf32>
    %27 = arith.maximumf %25, %26 : vector<16x128xf32>
    %28 = arith.truncf %27 : vector<16x128xf32> to vector<16x128xbf16>
    %cst_20 = arith.constant dense<0.000000e+00> : vector<32x128xf32>
    %29 = tpu.matmul %1, %28, %cst_20 {dimension_numbers = #tpu.dot_dimension_numbers<[1], [0], [0], [1], [0, 0, 1, 1], [], []>} : vector<32x16xbf16>, vector<16x128xbf16>, vector<32x128xf32> -> vector<32x128xf32>
    %30 = vector.broadcast %3 : vector<32x1xf32> to vector<32x128xf32>
    %31 = arith.addf %29, %30 : vector<32x128xf32>
    %cst_21 = arith.constant 0.000000e+00 : f32
    %32 = vector.broadcast %cst_21 : f32 to vector<32x128xf32>
    %33 = arith.maximumf %31, %32 : vector<32x128xf32>
    %34 = arith.truncf %33 : vector<32x128xf32> to vector<32x128xbf16>
    %c1_22 = arith.constant 1 : index
    %c0_23 = arith.constant 0 : index
    %c0_24 = arith.constant 0 : index
    %35 = vector.load %arg7[%c1_22, %c0_23, %c0_24] : memref<4x32x128xbf16, #tpu.memory_space<vmem>>, vector<1x32x128xbf16>
    %36 = vector.shape_cast %35 : vector<1x32x128xbf16> to vector<32x128xbf16>
    %37 = vector.shape_cast %34 : vector<32x128xbf16> to vector<1x32x128xbf16>
    tpu.vector_store %arg7[%c1_22, %c0_23, %c0_24], %37 {strides = array<i32>} : memref<4x32x128xbf16, #tpu.memory_space<vmem>>, vector<1x32x128xbf16>,
    %38 = arith.maximumf %16, %33 : vector<32x128xf32>
    %c2 = arith.constant 2 : index
    %c0_25 = arith.constant 0 : index
    %c0_26 = arith.constant 0 : index
    %39 = vector.load %arg2[%c2, %c0_25, %c0_26] : memref<4x16x128xbf16, #tpu.memory_space<vmem>>, vector<1x16x128xbf16>
    %40 = vector.shape_cast %39 : vector<1x16x128xbf16> to vector<16x128xbf16>
    %cst_27 = arith.constant dense<0.000000e+00> : vector<16x128xf32>
    %41 = tpu.matmul %0, %40, %cst_27 {dimension_numbers = #tpu.dot_dimension_numbers<[1], [0], [0], [1], [0, 0, 1, 1], [], []>} : vector<16x16xbf16>, vector<16x128xbf16>, vector<16x128xf32> -> vector<16x128xf32>
    %42 = vector.broadcast %2 : vector<16x1xf32> to vector<16x128xf32>
    %43 = arith.addf %41, %42 : vector<16x128xf32>
    %cst_28 = arith.constant 0.000000e+00 : f32
    %44 = vector.broadcast %cst_28 : f32 to vector<16x128xf32>
    %45 = arith.maximumf %43, %44 : vector<16x128xf32>
    %46 = arith.truncf %45 : vector<16x128xf32> to vector<16x128xbf16>
    %cst_29 = arith.constant dense<0.000000e+00> : vector<32x128xf32>
    %47 = tpu.matmul %1, %46, %cst_29 {dimension_numbers = #tpu.dot_dimension_numbers<[1], [0], [0], [1], [0, 0, 1, 1], [], []>} : vector<32x16xbf16>, vector<16x128xbf16>, vector<32x128xf32> -> vector<32x128xf32>
    %48 = vector.broadcast %3 : vector<32x1xf32> to vector<32x128xf32>
    %49 = arith.addf %47, %48 : vector<32x128xf32>
    %cst_30 = arith.constant 0.000000e+00 : f32
    %50 = vector.broadcast %cst_30 : f32 to vector<32x128xf32>
    %51 = arith.maximumf %49, %50 : vector<32x128xf32>
    %52 = arith.truncf %51 : vector<32x128xf32> to vector<32x128xbf16>
    %c2_31 = arith.constant 2 : index
    %c0_32 = arith.constant 0 : index
    %c0_33 = arith.constant 0 : index
    %53 = vector.load %arg7[%c2_31, %c0_32, %c0_33] : memref<4x32x128xbf16, #tpu.memory_space<vmem>>, vector<1x32x128xbf16>
    %54 = vector.shape_cast %53 : vector<1x32x128xbf16> to vector<32x128xbf16>
    %55 = vector.shape_cast %52 : vector<32x128xbf16> to vector<1x32x128xbf16>
    tpu.vector_store %arg7[%c2_31, %c0_32, %c0_33], %55 {strides = array<i32>} : memref<4x32x128xbf16, #tpu.memory_space<vmem>>, vector<1x32x128xbf16>,
    %56 = arith.maximumf %38, %51 : vector<32x128xf32>
    %c3 = arith.constant 3 : index
    %c0_34 = arith.constant 0 : index
    %c0_35 = arith.constant 0 : index
    %57 = vector.load %arg2[%c3, %c0_34, %c0_35] : memref<4x16x128xbf16, #tpu.memory_space<vmem>>, vector<1x16x128xbf16>
    %58 = vector.shape_cast %57 : vector<1x16x128xbf16> to vector<16x128xbf16>
    %cst_36 = arith.constant dense<0.000000e+00> : vector<16x128xf32>
    %59 = tpu.matmul %0, %58, %cst_36 {dimension_numbers = #tpu.dot_dimension_numbers<[1], [0], [0], [1], [0, 0, 1, 1], [], []>} : vector<16x16xbf16>, vector<16x128xbf16>, vector<16x128xf32> -> vector<16x128xf32>
    %60 = vector.broadcast %2 : vector<16x1xf32> to vector<16x128xf32>
    %61 = arith.addf %59, %60 : vector<16x128xf32>
    %cst_37 = arith.constant 0.000000e+00 : f32
    %62 = vector.broadcast %cst_37 : f32 to vector<16x128xf32>
    %63 = arith.maximumf %61, %62 : vector<16x128xf32>
    %64 = arith.truncf %63 : vector<16x128xf32> to vector<16x128xbf16>
    %cst_38 = arith.constant dense<0.000000e+00> : vector<32x128xf32>
    %65 = tpu.matmul %1, %64, %cst_38 {dimension_numbers = #tpu.dot_dimension_numbers<[1], [0], [0], [1], [0, 0, 1, 1], [], []>} : vector<32x16xbf16>, vector<16x128xbf16>, vector<32x128xf32> -> vector<32x128xf32>
    %66 = vector.broadcast %3 : vector<32x1xf32> to vector<32x128xf32>
    %67 = arith.addf %65, %66 : vector<32x128xf32>
    %cst_39 = arith.constant 0.000000e+00 : f32
    %68 = vector.broadcast %cst_39 : f32 to vector<32x128xf32>
    %69 = arith.maximumf %67, %68 : vector<32x128xf32>
    %70 = arith.truncf %69 : vector<32x128xf32> to vector<32x128xbf16>
    %c3_40 = arith.constant 3 : index
    %c0_41 = arith.constant 0 : index
    %c0_42 = arith.constant 0 : index
    %71 = vector.load %arg7[%c3_40, %c0_41, %c0_42] : memref<4x32x128xbf16, #tpu.memory_space<vmem>>, vector<1x32x128xbf16>
    %72 = vector.shape_cast %71 : vector<1x32x128xbf16> to vector<32x128xbf16>
    %73 = vector.shape_cast %70 : vector<32x128xbf16> to vector<1x32x128xbf16>
    tpu.vector_store %arg7[%c3_40, %c0_41, %c0_42], %73 {strides = array<i32>} : memref<4x32x128xbf16, #tpu.memory_space<vmem>>, vector<1x32x128xbf16>,
    %74 = arith.maximumf %56, %69 : vector<32x128xf32>
    %c0_i32 = arith.constant 0 : i32
    %75 = arith.cmpi eq, %arg1, %c0_i32 : i32
    %76 = arith.extui %75 : i1 to i32
    %c0_i32_43 = arith.constant 0 : i32
    %77 = arith.cmpi ne, %76, %c0_i32_43 : i32
    scf.if %77 {
      %c0_46 = arith.constant 0 : index
      %c0_47 = arith.constant 0 : index
      %81 = vector.load %arg8[%c0_46, %c0_47] : memref<32x128xf32, #tpu.memory_space<vmem>>, vector<32x128xf32>
      tpu.vector_store %arg8[%c0_46, %c0_47], %74 {strides = array<i32>} : memref<32x128xf32, #tpu.memory_space<vmem>>, vector<32x128xf32>,
    } else {
    }
    %c0_i32_44 = arith.constant 0 : i32
    %78 = arith.cmpi ne, %arg1, %c0_i32_44 : i32
    %79 = arith.extui %78 : i1 to i32
    %c0_i32_45 = arith.constant 0 : i32
    %80 = arith.cmpi ne, %79, %c0_i32_45 : i32
    scf.if %80 {
      %c0_46 = arith.constant 0 : index
      %c0_47 = arith.constant 0 : index
      %81 = vector.load %arg8[%c0_46, %c0_47] : memref<32x128xf32, #tpu.memory_space<vmem>>, vector<32x128xf32>
      %82 = arith.maximumf %81, %74 : vector<32x128xf32>
      %c0_48 = arith.constant 0 : index
      %c0_49 = arith.constant 0 : index
      %83 = vector.load %arg8[%c0_48, %c0_49] : memref<32x128xf32, #tpu.memory_space<vmem>>, vector<32x128xf32>
      tpu.vector_store %arg8[%c0_48, %c0_49], %82 {strides = array<i32>} : memref<32x128xf32, #tpu.memory_space<vmem>>, vector<32x128xf32>,
    } else {
    }
    return
  }
  func.func @transform_0(%arg0: i32, %arg1: i32) -> (i32, i32, i32) {
    %c0_i32 = arith.constant 0 : i32
    %c0_i32_0 = arith.constant 0 : i32
    return %arg1, %c0_i32, %arg0 : i32, i32, i32
  }
  func.func @transform_1(%arg0: i32, %arg1: i32) -> (i32, i32) {
    %c0_i32 = arith.constant 0 : i32
    %c0_i32_0 = arith.constant 0 : i32
    %c0_i32_1 = arith.constant 0 : i32
    return %c0_i32, %c0_i32_0 : i32, i32
  }
  func.func @transform_2(%arg0: i32, %arg1: i32) -> (i32, i32) {
    %c0_i32 = arith.constant 0 : i32
    %c0_i32_0 = arith.constant 0 : i32
    %c0_i32_1 = arith.constant 0 : i32
    return %c0_i32, %c0_i32_0 : i32, i32
  }
  func.func @transform_3(%arg0: i32, %arg1: i32) -> (i32, i32) {
    %c0_i32 = arith.constant 0 : i32
    %c0_i32_0 = arith.constant 0 : i32
    %c0_i32_1 = arith.constant 0 : i32
    return %c0_i32, %c0_i32_0 : i32, i32
  }
  func.func @transform_4(%arg0: i32, %arg1: i32) -> (i32, i32) {
    %c0_i32 = arith.constant 0 : i32
    %c0_i32_0 = arith.constant 0 : i32
    %c0_i32_1 = arith.constant 0 : i32
    return %c0_i32, %c0_i32_0 : i32, i32
  }
  func.func @transform_5(%arg0: i32, %arg1: i32) -> (i32, i32, i32) {
    %c0_i32 = arith.constant 0 : i32
    %c0_i32_0 = arith.constant 0 : i32
    return %arg1, %c0_i32, %arg0 : i32, i32, i32
  }
  func.func @transform_6(%arg0: i32, %arg1: i32) -> (i32, i32) {
    %c0_i32 = arith.constant 0 : i32
    %c0_i32_0 = arith.constant 0 : i32
    return %c0_i32, %arg0 : i32, i32
  }
}

module attributes {stable_mosaic.version = 11 : i64} {
  func.func @kernel(%arg0: i32, %arg1: i32, %arg2: memref<4x16x128xbf16, #tpu.memory_space<vmem>>, %arg3: memref<16x16xbf16, #tpu.memory_space<vmem>>, %arg4: memref<16x1xf32, #tpu.memory_space<vmem>>, %arg5: memref<32x16xbf16, #tpu.memory_space<vmem>>, %arg6: memref<32x1xf32, #tpu.memory_space<vmem>>, %arg7: memref<4x32x128xbf16, #tpu.memory_space<vmem>>, %arg8: memref<32x128xf32, #tpu.memory_space<vmem>>) attributes {dimension_semantics = [#tpu.dimension_semantics<parallel>, #tpu.dimension_semantics<arbitrary>], iteration_bounds = array<i64: 1, 2>, scalar_prefetch = 0 : i64, scratch_operands = 0 : i64, tpu.core_type = #tpu.core_type<tc>, window_params = [{transform_indices = @transform_0, window_bounds = array<i64: 4, 16, 128>}, {pipeline_mode = #tpu.pipeline_mode<synchronous>, transform_indices = @transform_1, window_bounds = array<i64: 16, 16>}, {pipeline_mode = #tpu.pipeline_mode<synchronous>, transform_indices = @transform_2, window_bounds = array<i64: 16, 1>}, {pipeline_mode = #tpu.pipeline_mode<synchronous>, transform_indices = @transform_3, window_bounds = array<i64: 32, 16>}, {pipeline_mode = #tpu.pipeline_mode<synchronous>, transform_indices = @transform_4, window_bounds = array<i64: 32, 1>}, {transform_indices = @transform_5, window_bounds = array<i64: 4, 32, 128>}, {transform_indices = @transform_6, window_bounds = array<i64: 32, 128>}]} {
    %c0 = arith.constant 0 : index
    %c0_0 = arith.constant 0 : index
    %0 = vector.load %arg3[%c0, %c0_0] : memref<16x16xbf16, #tpu.memory_space<vmem>>, vector<16x16xbf16>
    %c0_1 = arith.constant 0 : index
    %c0_2 = arith.constant 0 : index
    %1 = vector.load %arg5[%c0_1, %c0_2] : memref<32x16xbf16, #tpu.memory_space<vmem>>, vector<32x16xbf16>
    %c0_3 = arith.constant 0 : index
    %c0_4 = arith.constant 0 : index
    %2 = vector.load %arg4[%c0_3, %c0_4] : memref<16x1xf32, #tpu.memory_space<vmem>>, vector<16x1xf32>
    %c0_5 = arith.constant 0 : index
    %c0_6 = arith.constant 0 : index
    %3 = vector.load %arg6[%c0_5, %c0_6] : memref<32x1xf32, #tpu.memory_space<vmem>>, vector<32x1xf32>
    %c0_7 = arith.constant 0 : index
    %c0_8 = arith.constant 0 : index
    %c0_9 = arith.constant 0 : index
    %4 = vector.load %arg2[%c0_7, %c0_8, %c0_9] : memref<4x16x128xbf16, #tpu.memory_space<vmem>>, vector<1x16x128xbf16>
    %5 = vector.shape_cast %4 : vector<1x16x128xbf16> to vector<16x128xbf16>
    %cst = arith.constant dense<0.000000e+00> : vector<16x128xf32>
    %6 = tpu.matmul %0, %5, %cst {dimension_numbers = #tpu.dot_dimension_numbers<[1], [0], [0], [1], [0, 0, 1, 1], [], []>} : vector<16x16xbf16>, vector<16x128xbf16>, vector<16x128xf32> -> vector<16x128xf32>
    %7 = vector.broadcast %2 : vector<16x1xf32> to vector<16x128xf32>
    %8 = arith.addf %6, %7 : vector<16x128xf32>
    %cst_10 = arith.constant 0.000000e+00 : f32
    %9 = vector.broadcast %cst_10 : f32 to vector<16x128xf32>
    %10 = arith.maximumf %8, %9 : vector<16x128xf32>
    %11 = arith.truncf %10 : vector<16x128xf32> to vector<16x128xbf16>
    %cst_11 = arith.constant dense<0.000000e+00> : vector<32x128xf32>
    %12 = tpu.matmul %1, %11, %cst_11 {dimension_numbers = #tpu.dot_dimension_numbers<[1], [0], [0], [1], [0, 0, 1, 1], [], []>} : vector<32x16xbf16>, vector<16x128xbf16>, vector<32x128xf32> -> vector<32x128xf32>
    %13 = vector.broadcast %3 : vector<32x1xf32> to vector<32x128xf32>
    %14 = arith.addf %12, %13 : vector<32x128xf32>
    %cst_12 = arith.constant 0.000000e+00 : f32
    %15 = vector.broadcast %cst_12 : f32 to vector<32x128xf32>
    %16 = arith.maximumf %14, %15 : vector<32x128xf32>
    %17 = arith.truncf %16 : vector<32x128xf32> to vector<32x128xbf16>
    %c0_13 = arith.constant 0 : index
    %c0_14 = arith.constant 0 : index
    %c0_15 = arith.constant 0 : index
    %18 = vector.load %arg7[%c0_13, %c0_14, %c0_15] : memref<4x32x128xbf16, #tpu.memory_space<vmem>>, vector<1x32x128xbf16>
    %19 = vector.shape_cast %18 : vector<1x32x128xbf16> to vector<32x128xbf16>
    %20 = vector.shape_cast %17 : vector<32x128xbf16> to vector<1x32x128xbf16>
    tpu.vector_store %arg7[%c0_13, %c0_14, %c0_15], %20 {strides = array<i32>} : memref<4x32x128xbf16, #tpu.memory_space<vmem>>, vector<1x32x128xbf16>,
    %c1 = arith.constant 1 : index
    %c0_16 = arith.constant 0 : index
    %c0_17 = arith.constant 0 : index
    %21 = vector.load %arg2[%c1, %c0_16, %c0_17] : memref<4x16x128xbf16, #tpu.memory_space<vmem>>, vector<1x16x128xbf16>
    %22 = vector.shape_cast %21 : vector<1x16x128xbf16> to vector<16x128xbf16>
    %cst_18 = arith.constant dense<0.000000e+00> : vector<16x128xf32>
    %23 = tpu.matmul %0, %22, %cst_18 {dimension_numbers = #tpu.dot_dimension_numbers<[1], [0], [0], [1], [0, 0, 1, 1], [], []>} : vector<16x16xbf16>, vector<16x128xbf16>, vector<16x128xf32> -> vector<16x128xf32>
    %24 = vector.broadcast %2 : vector<16x1xf32> to vector<16x128xf32>
    %25 = arith.addf %23, %24 : vector<16x128xf32>
    %cst_19 = arith.constant 0.000000e+00 : f32
    %26 = vector.broadcast %cst_19 : f32 to vector<16x128xf32>
    %27 = arith.maximumf %25, %26 : vector<16x128xf32>
    %28 = arith.truncf %27 : vector<16x128xf32> to vector<16x128xbf16>
    %cst_20 = arith.constant dense<0.000000e+00> : vector<32x128xf32>
    %29 = tpu.matmul %1, %28, %cst_20 {dimension_numbers = #tpu.dot_dimension_numbers<[1], [0], [0], [1], [0, 0, 1, 1], [], []>} : vector<32x16xbf16>, vector<16x128xbf16>, vector<32x128xf32> -> vector<32x128xf32>
    %30 = vector.broadcast %3 : vector<32x1xf32> to vector<32x128xf32>
    %31 = arith.addf %29, %30 : vector<32x128xf32>
    %cst_21 = arith.constant 0.000000e+00 : f32
    %32 = vector.broadcast %cst_21 : f32 to vector<32x128xf32>
    %33 = arith.maximumf %31, %32 : vector<32x128xf32>
    %34 = arith.truncf %33 : vector<32x128xf32> to vector<32x128xbf16>
    %c1_22 = arith.constant 1 : index
    %c0_23 = arith.constant 0 : index
    %c0_24 = arith.constant 0 : index
    %35 = vector.load %arg7[%c1_22, %c0_23, %c0_24] : memref<4x32x128xbf16, #tpu.memory_space<vmem>>, vector<1x32x128xbf16>
    %36 = vector.shape_cast %35 : vector<1x32x128xbf16> to vector<32x128xbf16>
    %37 = vector.shape_cast %34 : vector<32x128xbf16> to vector<1x32x128xbf16>
    tpu.vector_store %arg7[%c1_22, %c0_23, %c0_24], %37 {strides = array<i32>} : memref<4x32x128xbf16, #tpu.memory_space<vmem>>, vector<1x32x128xbf16>,
    %38 = arith.maximumf %16, %33 : vector<32x128xf32>
    %c2 = arith.constant 2 : index
    %c0_25 = arith.constant 0 : index
    %c0_26 = arith.constant 0 : index
    %39 = vector.load %arg2[%c2, %c0_25, %c0_26] : memref<4x16x128xbf16, #tpu.memory_space<vmem>>, vector<1x16x128xbf16>
    %40 = vector.shape_cast %39 : vector<1x16x128xbf16> to vector<16x128xbf16>
    %cst_27 = arith.constant dense<0.000000e+00> : vector<16x128xf32>
    %41 = tpu.matmul %0, %40, %cst_27 {dimension_numbers = #tpu.dot_dimension_numbers<[1], [0], [0], [1], [0, 0, 1, 1], [], []>} : vector<16x16xbf16>, vector<16x128xbf16>, vector<16x128xf32> -> vector<16x128xf32>
    %42 = vector.broadcast %2 : vector<16x1xf32> to vector<16x128xf32>
    %43 = arith.addf %41, %42 : vector<16x128xf32>
    %cst_28 = arith.constant 0.000000e+00 : f32
    %44 = vector.broadcast %cst_28 : f32 to vector<16x128xf32>
    %45 = arith.maximumf %43, %44 : vector<16x128xf32>
    %46 = arith.truncf %45 : vector<16x128xf32> to vector<16x128xbf16>
    %cst_29 = arith.constant dense<0.000000e+00> : vector<32x128xf32>
    %47 = tpu.matmul %1, %46, %cst_29 {dimension_numbers = #tpu.dot_dimension_numbers<[1], [0], [0], [1], [0, 0, 1, 1], [], []>} : vector<32x16xbf16>, vector<16x128xbf16>, vector<32x128xf32> -> vector<32x128xf32>
    %48 = vector.broadcast %3 : vector<32x1xf32> to vector<32x128xf32>
    %49 = arith.addf %47, %48 : vector<32x128xf32>
    %cst_30 = arith.constant 0.000000e+00 : f32
    %50 = vector.broadcast %cst_30 : f32 to vector<32x128xf32>
    %51 = arith.maximumf %49, %50 : vector<32x128xf32>
    %52 = arith.truncf %51 : vector<32x128xf32> to vector<32x128xbf16>
    %c2_31 = arith.constant 2 : index
    %c0_32 = arith.constant 0 : index
    %c0_33 = arith.constant 0 : index
    %53 = vector.load %arg7[%c2_31, %c0_32, %c0_33] : memref<4x32x128xbf16, #tpu.memory_space<vmem>>, vector<1x32x128xbf16>
    %54 = vector.shape_cast %53 : vector<1x32x128xbf16> to vector<32x128xbf16>
    %55 = vector.shape_cast %52 : vector<32x128xbf16> to vector<1x32x128xbf16>
    tpu.vector_store %arg7[%c2_31, %c0_32, %c0_33], %55 {strides = array<i32>} : memref<4x32x128xbf16, #tpu.memory_space<vmem>>, vector<1x32x128xbf16>,
    %56 = arith.maximumf %38, %51 : vector<32x128xf32>
    %c3 = arith.constant 3 : index
    %c0_34 = arith.constant 0 : index
    %c0_35 = arith.constant 0 : index
    %57 = vector.load %arg2[%c3, %c0_34, %c0_35] : memref<4x16x128xbf16, #tpu.memory_space<vmem>>, vector<1x16x128xbf16>
    %58 = vector.shape_cast %57 : vector<1x16x128xbf16> to vector<16x128xbf16>
    %cst_36 = arith.constant dense<0.000000e+00> : vector<16x128xf32>
    %59 = tpu.matmul %0, %58, %cst_36 {dimension_numbers = #tpu.dot_dimension_numbers<[1], [0], [0], [1], [0, 0, 1, 1], [], []>} : vector<16x16xbf16>, vector<16x128xbf16>, vector<16x128xf32> -> vector<16x128xf32>
    %60 = vector.broadcast %2 : vector<16x1xf32> to vector<16x128xf32>
    %61 = arith.addf %59, %60 : vector<16x128xf32>
    %cst_37 = arith.constant 0.000000e+00 : f32
    %62 = vector.broadcast %cst_37 : f32 to vector<16x128xf32>
    %63 = arith.maximumf %61, %62 : vector<16x128xf32>
    %64 = arith.truncf %63 : vector<16x128xf32> to vector<16x128xbf16>
    %cst_38 = arith.constant dense<0.000000e+00> : vector<32x128xf32>
    %65 = tpu.matmul %1, %64, %cst_38 {dimension_numbers = #tpu.dot_dimension_numbers<[1], [0], [0], [1], [0, 0, 1, 1], [], []>} : vector<32x16xbf16>, vector<16x128xbf16>, vector<32x128xf32> -> vector<32x128xf32>
    %66 = vector.broadcast %3 : vector<32x1xf32> to vector<32x128xf32>
    %67 = arith.addf %65, %66 : vector<32x128xf32>
    %cst_39 = arith.constant 0.000000e+00 : f32
    %68 = vector.broadcast %cst_39 : f32 to vector<32x128xf32>
    %69 = arith.maximumf %67, %68 : vector<32x128xf32>
    %70 = arith.truncf %69 : vector<32x128xf32> to vector<32x128xbf16>
    %c3_40 = arith.constant 3 : index
    %c0_41 = arith.constant 0 : index
    %c0_42 = arith.constant 0 : index
    %71 = vector.load %arg7[%c3_40, %c0_41, %c0_42] : memref<4x32x128xbf16, #tpu.memory_space<vmem>>, vector<1x32x128xbf16>
    %72 = vector.shape_cast %71 : vector<1x32x128xbf16> to vector<32x128xbf16>
    %73 = vector.shape_cast %70 : vector<32x128xbf16> to vector<1x32x128xbf16>
    tpu.vector_store %arg7[%c3_40, %c0_41, %c0_42], %73 {strides = array<i32>} : memref<4x32x128xbf16, #tpu.memory_space<vmem>>, vector<1x32x128xbf16>,
    %74 = arith.maximumf %56, %69 : vector<32x128xf32>
    %c0_i32 = arith.constant 0 : i32
    %75 = arith.cmpi eq, %arg1, %c0_i32 : i32
    %76 = arith.extui %75 : i1 to i32
    %c0_i32_43 = arith.constant 0 : i32
    %77 = arith.cmpi ne, %76, %c0_i32_43 : i32
    scf.if %77 {
      %c0_46 = arith.constant 0 : index
      %c0_47 = arith.constant 0 : index
      %81 = vector.load %arg8[%c0_46, %c0_47] : memref<32x128xf32, #tpu.memory_space<vmem>>, vector<32x128xf32>
      tpu.vector_store %arg8[%c0_46, %c0_47], %74 {strides = array<i32>} : memref<32x128xf32, #tpu.memory_space<vmem>>, vector<32x128xf32>,
    } else {
    }
    %c0_i32_44 = arith.constant 0 : i32
    %78 = arith.cmpi ne, %arg1, %c0_i32_44 : i32
    %79 = arith.extui %78 : i1 to i32
    %c0_i32_45 = arith.constant 0 : i32
    %80 = arith.cmpi ne, %79, %c0_i32_45 : i32
    scf.if %80 {
      %c0_46 = arith.constant 0 : index
      %c0_47 = arith.constant 0 : index
      %81 = vector.load %arg8[%c0_46, %c0_47] : memref<32x128xf32, #tpu.memory_space<vmem>>, vector<32x128xf32>
      %82 = arith.maximumf %81, %74 : vector<32x128xf32>
      %c0_48 = arith.constant 0 : index
      %c0_49 = arith.constant 0 : index
      %83 = vector.load %arg8[%c0_48, %c0_49] : memref<32x128xf32, #tpu.memory_space<vmem>>, vector<32x128xf32>
      tpu.vector_store %arg8[%c0_48, %c0_49], %82 {strides = array<i32>} : memref<32x128xf32, #tpu.memory_space<vmem>>, vector<32x128xf32>,
    } else {
    }
    return
  }
  func.func @transform_0(%arg0: i32, %arg1: i32) -> (i32, i32, i32) {
    %c0_i32 = arith.constant 0 : i32
    %c0_i32_0 = arith.constant 0 : i32
    return %arg1, %c0_i32, %arg0 : i32, i32, i32
  }
  func.func @transform_1(%arg0: i32, %arg1: i32) -> (i32, i32) {
    %c0_i32 = arith.constant 0 : i32
    %c0_i32_0 = arith.constant 0 : i32
    %c0_i32_1 = arith.constant 0 : i32
    return %c0_i32, %c0_i32_0 : i32, i32
  }
  func.func @transform_2(%arg0: i32, %arg1: i32) -> (i32, i32) {
    %c0_i32 = arith.constant 0 : i32
    %c0_i32_0 = arith.constant 0 : i32
    %c0_i32_1 = arith.constant 0 : i32
    return %c0_i32, %c0_i32_0 : i32, i32
  }
  func.func @transform_3(%arg0: i32, %arg1: i32) -> (i32, i32) {
    %c0_i32 = arith.constant 0 : i32
    %c0_i32_0 = arith.constant 0 : i32
    %c0_i32_1 = arith.constant 0 : i32
    return %c0_i32, %c0_i32_0 : i32, i32
  }
  func.func @transform_4(%arg0: i32, %arg1: i32) -> (i32, i32) {
    %c0_i32 = arith.constant 0 : i32
    %c0_i32_0 = arith.constant 0 : i32
    %c0_i32_1 = arith.constant 0 : i32
    return %c0_i32, %c0_i32_0 : i32, i32
  }
  func.func @transform_5(%arg0: i32, %arg1: i32) -> (i32, i32, i32) {
    %c0_i32 = arith.constant 0 : i32
    %c0_i32_0 = arith.constant 0 : i32
    return %arg1, %c0_i32, %arg0 : i32, i32, i32
  }
  func.func @transform_6(%arg0: i32, %arg1: i32) -> (i32, i32) {
    %c0_i32 = arith.constant 0 : i32
    %c0_i32_0 = arith.constant 0 : i32
    return %c0_i32, %arg0 : i32, i32
  }
}

</mosaic_0001>

<llo_original>
// kernel: custom-call.14
$region0: #{custom-call.14}
  %s0 = inlined_call_operand.vmem [shape: f32[2,16], index: 0, kind: output, shape index: {}]

// kernel: a_call__.2
$region0: #{a_call__.2}
  #allocation0 [shape = 'u32[]', space=smem, size = 0x4, offset = 0x4, fixed_abs, tag = 'smem constant byte address 0x4 - core index']
  #allocation1 [shape = 'u32[144,128]{1,0:T(1,128)}', space=vmem, size = 0x12000, scoped, tag = 'internal scratch']
  %s0 = inlined_call_operand.vmem [shape: bf16[4,16,128], index: 0, kind: input, shape index: {}]
  %s1 = inlined_call_operand.vmem [shape: bf16[16,16], index: 1, kind: input, shape index: {}]
  %s2 = inlined_call_operand.vmem [shape: f32[16,1], index: 2, kind: input, shape index: {}]
  %s3 = inlined_call_operand.vmem [shape: bf16[32,16], index: 3, kind: input, shape index: {}]
  %s4 = inlined_call_operand.vmem [shape: f32[32,1], index: 4, kind: input, shape index: {}]
  %s5 = inlined_call_operand.vmem [shape: bf16[4,32,128], index: 5, kind: output, shape index: {0}]
  %s6 = inlined_call_operand.vmem [shape: f32[32,128], index: 6, kind: output, shape index: {1}]
  %7 = xla_tuple %s5, %s6
  %s8 = sld [smem:[#allocation0]]
  $region46: #{a_call__.2} parent=0
    _
  %s10 = ssub.s32 1, %s8
  %s11 = scalar_select 0, %s10, %s8
  // Predicated region
  $region2: #{a_call__.2} parent=0 // pred_check
    _
  $region3: #{a_call__.2} parent=0 // pred_check_branch
    %13 = sbr.rel (0) target = $region5
  $region4: #{a_call__.2} parent=0 // pred_region
    _
  $region5: #{a_call__.2} parent=0 // pred_fallthru
    _
  // Predicated region
  $region6: #{a_call__.2} parent=0 // pred_check
    _
  $region7: #{a_call__.2} parent=0 // pred_check_branch
    %15 = sbr.rel (0) target = $region9
  $region8: #{a_call__.2} parent=0 // pred_region
    _
  $region9: #{a_call__.2} parent=0 // pred_fallthru
    _
  // Predicated region
  $region10: #{a_call__.2} parent=0 // pred_check
    _
  $region11: #{a_call__.2} parent=0 // pred_check_branch
    %17 = sbr.rel (0) target = $region13
  $region12: #{a_call__.2} parent=0 // pred_region
    _
  $region13: #{a_call__.2} parent=0 // pred_fallthru
    _
  // Predicated region
  $region14: #{a_call__.2} parent=0 // pred_check
    _
  $region15: #{a_call__.2} parent=0 // pred_check_branch
    %19 = sbr.rel (0) target = $region17
  $region16: #{a_call__.2} parent=0 // pred_region
    _
  $region17: #{a_call__.2} parent=0 // pred_fallthru
    _
  // Predicated region
  $region18: #{a_call__.2} parent=0 // pred_check
    _
  $region19: #{a_call__.2} parent=0 // pred_check_branch
    %21 = sbr.rel (0) target = $region21
  $region20: #{a_call__.2} parent=0 // pred_region
    _
  $region21: #{a_call__.2} parent=0 // pred_fallthru
    _
  %v23 = vld [vmem:[%s1] sm:$0xf]
  %v24 = vld [vmem:[%s1 + $0x4] sm:$0xf]
  %v25 = vld [vmem:[%s3] sm:$0xf]
  %v26 = vld [vmem:[%s3 + $0x4] sm:$0xf]
  %v27 = vld [vmem:[%s3 + $0x8] sm:$0xf]
  %v28 = vld [vmem:[%s3 + $0xc] sm:$0xf]
  %v29 = vld [vmem:[%s2] sm:$0xff]
  %v30 = vld [vmem:[%s2 + $0x8] sm:$0xff]
  %v31 = vld [vmem:[%s4] sm:$0xff]
  %v32 = vld [vmem:[%s4 + $0x8] sm:$0xff]
  %v33 = vld [vmem:[%s4 + $0x10] sm:$0xff]
  %v34 = vld [vmem:[%s4 + $0x18] sm:$0xff]
  %v35 = vld [vmem:[%s0] sm:$0xf]
  %v36 = vld [vmem:[%s0 + $0x4] sm:$0xf]
  %38 = vset.pattern.permute.xlu0 0
  %39 = vperm.xlu0 %38, %v29
  %v40 = vpop.permute.xlu0 %39
  %43 = vset.pattern.permute.xlu0 0
  %44 = vperm.xlu0 %43, %v30
  %v45 = vpop.permute.xlu0 %44
  %v49 = vunpack.c.l.b16 %v23
  %v50 = vunpack.c.l.b16 %v24
  %v51 = vpack.c.b16 %v50, %v49
  %v54 = vunpack.c.l.b16 %v35
  %v55 = vunpack.c.l.b16 %v36
  %v56 = vpack.c.b16 %v55, %v54
  %vm58 = vcmask 130048
  %v60 = vsel %vm58, %v51, 0
  %62 = vmatprep.subr.bf16.mxu0 0
  %63 = vmatpush1.bf16.msra.mxu0 %v56
  %64 = vmatprep.subr.bf16.mxu0 0
  %65 = vmatpush1.bf16.msra.mxu0 0
  %66 = vmatprep.subr.bf16.mxu0 0
  %67 = vmatpush1.bf16.msra.mxu0 0
  %68 = vmatprep.subr.bf16.mxu0 0
  %69 = vmatpush1.bf16.msra.mxu0 0
  %70 = vmatprep.subr.bf16.mxu0 0
  %71 = vmatpush1.bf16.msra.mxu0 0
  %72 = vmatprep.subr.bf16.mxu0 0
  %73 = vmatpush1.bf16.msra.mxu0 0
  %74 = vmatprep.subr.bf16.mxu0 0
  %75 = vmatpush1.bf16.msra.mxu0 0
  %76 = vmatprep.subr.bf16.mxu0 0
  %77 = vmatpush1.bf16.msra.mxu0 0
  %78 = vmatprep.subr.bf16.mxu0 0
  %79 = vmatpush1.bf16.msra.mxu0 0
  %80 = vmatprep.subr.bf16.mxu0 0
  %81 = vmatpush1.bf16.msra.mxu0 0
  %82 = vmatprep.subr.bf16.mxu0 0
  %83 = vmatpush1.bf16.msra.mxu0 0
  %84 = vmatprep.subr.bf16.mxu0 0
  %85 = vmatpush1.bf16.msra.mxu0 0
  %86 = vmatprep.subr.bf16.mxu0 0
  %87 = vmatpush1.bf16.msra.mxu0 0
  %88 = vmatprep.subr.bf16.mxu0 0
  %89 = vmatpush1.bf16.msra.mxu0 0
  %90 = vmatprep.subr.bf16.mxu0 0
  %91 = vmatpush1.bf16.msra.mxu0 0
  %92 = vmatprep.subr.bf16.mxu0 0
  %93 = vmatpush1.bf16.msra.mxu0 0
  %94 = vmatprep.mubr.bf16.mxu0 0
  %95 = vmatmul.mubr.bf16.gmra.mrb[0].mxu0 %v60
  %v96 = vpop.f32.mrb[0].mxu0
  %v97 = vadd.f32 %v40, %v96
  %v98 = vpop.f32.mrb[0].mxu0
  %v99 = vpop.f32.mrb[0].mxu0
  %v100 = vadd.f32 %v45, %v99
  %v101 = vpop.f32.mrb[0].mxu0
  %102 = vdwg.mxu0
  %v103 = vmax.f32 %v97, 0.0
  %v104 = vmax.f32 %v100, 0.0
  %v105 = vpack.c.bf16 %v104, %v103
  %107 = vset.pattern.permute.xlu0 0
  %108 = vperm.xlu0 %107, %v31
  %v109 = vpop.permute.xlu0 %108
  %112 = vset.pattern.permute.xlu0 0
  %113 = vperm.xlu0 %112, %v32
  %v114 = vpop.permute.xlu0 %113
  %117 = vset.pattern.permute.xlu0 0
  %118 = vperm.xlu0 %117, %v33
  %v119 = vpop.permute.xlu0 %118
  %122 = vset.pattern.permute.xlu0 0
  %123 = vperm.xlu0 %122, %v34
  %v124 = vpop.permute.xlu0 %123
  %v130 = vunpack.c.l.b16 %v25
  %v131 = vunpack.c.l.b16 %v26
  %v132 = vunpack.c.l.b16 %v27
  %v133 = vunpack.c.l.b16 %v28
  %v134 = vpack.c.b16 %v131, %v130
  %v135 = vpack.c.b16 %v133, %v132
  %v137 = vsel %vm58, %v134, 0
  %v140 = vsel %vm58, %v135, 0
  %142 = vmatprep.subr.bf16.mxu0 0
  %143 = vmatpush1.bf16.msra.mxu0 %v105
  %144 = vmatprep.subr.bf16.mxu0 0
  %145 = vmatpush1.bf16.msra.mxu0 0
  %146 = vmatprep.subr.bf16.mxu0 0
  %147 = vmatpush1.bf16.msra.mxu0 0
  %148 = vmatprep.subr.bf16.mxu0 0
  %149 = vmatpush1.bf16.msra.mxu0 0
  %150 = vmatprep.subr.bf16.mxu0 0
  %151 = vmatpush1.bf16.msra.mxu0 0
  %152 = vmatprep.subr.bf16.mxu0 0
  %153 = vmatpush1.bf16.msra.mxu0 0
  %154 = vmatprep.subr.bf16.mxu0 0
  %155 = vmatpush1.bf16.msra.mxu0 0
  %156 = vmatprep.subr.bf16.mxu0 0
  %157 = vmatpush1.bf16.msra.mxu0 0
  %158 = vmatprep.subr.bf16.mxu0 0
  %159 = vmatpush1.bf16.msra.mxu0 0
  %160 = vmatprep.subr.bf16.mxu0 0
  %161 = vmatpush1.bf16.msra.mxu0 0
  %162 = vmatprep.subr.bf16.mxu0 0
  %163 = vmatpush1.bf16.msra.mxu0 0
  %164 = vmatprep.subr.bf16.mxu0 0
  %165 = vmatpush1.bf16.msra.mxu0 0
  %166 = vmatprep.subr.bf16.mxu0 0
  %167 = vmatpush1.bf16.msra.mxu0 0
  %168 = vmatprep.subr.bf16.mxu0 0
  %169 = vmatpush1.bf16.msra.mxu0 0
  %170 = vmatprep.subr.bf16.mxu0 0
  %171 = vmatpush1.bf16.msra.mxu0 0
  %172 = vmatprep.subr.bf16.mxu0 0
  %173 = vmatpush1.bf16.msra.mxu0 0
  %174 = vmatprep.mubr.bf16.mxu0 0
  %175 = vmatmul.mubr.bf16.gmra.mrb[0].mxu0 %v137
  %v176 = vpop.f32.mrb[0].mxu0
  %v177 = vadd.f32 %v109, %v176
  %v178 = vpop.f32.mrb[0].mxu0
  %v179 = vpop.f32.mrb[0].mxu0
  %v180 = vadd.f32 %v114, %v179
  %v181 = vpop.f32.mrb[0].mxu0
  %182 = vmatprep.mubr.bf16.mxu0 0
  %183 = vmatmul.mubr.bf16.gmra.mrb[0].mxu0 %v140
  %v184 = vpop.f32.mrb[0].mxu0
  %v185 = vadd.f32 %v119, %v184
  %v186 = vpop.f32.mrb[0].mxu0
  %v187 = vpop.f32.mrb[0].mxu0
  %v188 = vadd.f32 %v124, %v187
  %v189 = vpop.f32.mrb[0].mxu0
  %190 = vdwg.mxu0
  %v191 = vmax.f32 %v177, 0.0
  %v192 = vmax.f32 %v180, 0.0
  %v193 = vmax.f32 %v185, 0.0
  %v194 = vmax.f32 %v188, 0.0
  %v195 = vpack.c.bf16 %v192, %v191
  %v196 = vpack.c.bf16 %v194, %v193
  %v199 = vunpack.c.l.b16 %v195
  %v200 = vunpack.c.h.b16 %v195
  %v201 = vunpack.c.l.b16 %v196
  %v202 = vunpack.c.h.b16 %v196
  %v203 = vpack.c.b16 %v199, %v199
  %v204 = vpack.c.b16 %v200, %v200
  %v205 = vpack.c.b16 %v201, %v201
  %v206 = vpack.c.b16 %v202, %v202
  %211 = vst [vmem:[%s5] sm:$0xf] %v203
  %212 = vst [vmem:[%s5 + $0x4] sm:$0xf] %v204
  %213 = vst [vmem:[%s5 + $0x8] sm:$0xf] %v205
  %214 = vst [vmem:[%s5 + $0xc] sm:$0xf] %v206
  %s215 = scalar_lea.vmem %s0, 8
  %v216 = vld [vmem:[%s215] sm:$0xf]
  %v217 = vld [vmem:[%s215 + $0x4] sm:$0xf]
  %v220 = vunpack.c.l.b16 %v216
  %v221 = vunpack.c.l.b16 %v217
  %v222 = vpack.c.b16 %v221, %v220
  %224 = vmatprep.subr.bf16.mxu0 0
  %225 = vmatpush1.bf16.msra.mxu0 %v222
  %226 = vmatprep.subr.bf16.mxu0 0
  %227 = vmatpush1.bf16.msra.mxu0 0
  %228 = vmatprep.subr.bf16.mxu0 0
  %229 = vmatpush1.bf16.msra.mxu0 0
  %230 = vmatprep.subr.bf16.mxu0 0
  %231 = vmatpush1.bf16.msra.mxu0 0
  %232 = vmatprep.subr.bf16.mxu0 0
  %233 = vmatpush1.bf16.msra.mxu0 0
  %234 = vmatprep.subr.bf16.mxu0 0
  %235 = vmatpush1.bf16.msra.mxu0 0
  %236 = vmatprep.subr.bf16.mxu0 0
  %237 = vmatpush1.bf16.msra.mxu0 0
  %238 = vmatprep.subr.bf16.mxu0 0
  %239 = vmatpush1.bf16.msra.mxu0 0
  %240 = vmatprep.subr.bf16.mxu0 0
  %241 = vmatpush1.bf16.msra.mxu0 0
  %242 = vmatprep.subr.bf16.mxu0 0
  %243 = vmatpush1.bf16.msra.mxu0 0
  %244 = vmatprep.subr.bf16.mxu0 0
  %245 = vmatpush1.bf16.msra.mxu0 0
  %246 = vmatprep.subr.bf16.mxu0 0
  %247 = vmatpush1.bf16.msra.mxu0 0
  %248 = vmatprep.subr.bf16.mxu0 0
  %249 = vmatpush1.bf16.msra.mxu0 0
  %250 = vmatprep.subr.bf16.mxu0 0
  %251 = vmatpush1.bf16.msra.mxu0 0
  %252 = vmatprep.subr.bf16.mxu0 0
  %253 = vmatpush1.bf16.msra.mxu0 0
  %254 = vmatprep.subr.bf16.mxu0 0
  %255 = vmatpush1.bf16.msra.mxu0 0
  %256 = vmatprep.mubr.bf16.mxu0 0
  %257 = vmatmul.mubr.bf16.gmra.mrb[0].mxu0 %v60
  %v258 = vpop.f32.mrb[0].mxu0
  %v259 = vadd.f32 %v40, %v258
  %v260 = vpop.f32.mrb[0].mxu0
  %v261 = vpop.f32.mrb[0].mxu0
  %v262 = vadd.f32 %v45, %v261
  %v263 = vpop.f32.mrb[0].mxu0
  %264 = vdwg.mxu0
  %v265 = vmax.f32 %v259, 0.0
  %v266 = vmax.f32 %v262, 0.0
  %v267 = vpack.c.bf16 %v266, %v265
  %268 = vmatprep.subr.bf16.mxu0 0
  %269 = vmatpush1.bf16.msra.mxu0 %v267
  %270 = vmatprep.subr.bf16.mxu0 0
  %271 = vmatpush1.bf16.msra.mxu0 0
  %272 = vmatprep.subr.bf16.mxu0 0
  %273 = vmatpush1.bf16.msra.mxu0 0
  %274 = vmatprep.subr.bf16.mxu0 0
  %275 = vmatpush1.bf16.msra.mxu0 0
  %276 = vmatprep.subr.bf16.mxu0 0
  %277 = vmatpush1.bf16.msra.mxu0 0
  %278 = vmatprep.subr.bf16.mxu0 0
  %279 = vmatpush1.bf16.msra.mxu0 0
  %280 = vmatprep.subr.bf16.mxu0 0
  %281 = vmatpush1.bf16.msra.mxu0 0
  %282 = vmatprep.subr.bf16.mxu0 0
  %283 = vmatpush1.bf16.msra.mxu0 0
  %284 = vmatprep.subr.bf16.mxu0 0
  %285 = vmatpush1.bf16.msra.mxu0 0
  %286 = vmatprep.subr.bf16.mxu0 0
  %287 = vmatpush1.bf16.msra.mxu0 0
  %288 = vmatprep.subr.bf16.mxu0 0
  %289 = vmatpush1.bf16.msra.mxu0 0
  %290 = vmatprep.subr.bf16.mxu0 0
  %291 = vmatpush1.bf16.msra.mxu0 0
  %292 = vmatprep.subr.bf16.mxu0 0
  %293 = vmatpush1.bf16.msra.mxu0 0
  %294 = vmatprep.subr.bf16.mxu0 0
  %295 = vmatpush1.bf16.msra.mxu0 0
  %296 = vmatprep.subr.bf16.mxu0 0
  %297 = vmatpush1.bf16.msra.mxu0 0
  %298 = vmatprep.subr.bf16.mxu0 0
  %299 = vmatpush1.bf16.msra.mxu0 0
  %300 = vmatprep.mubr.bf16.mxu0 0
  %301 = vmatmul.mubr.bf16.gmra.mrb[0].mxu0 %v137
  %v302 = vpop.f32.mrb[0].mxu0
  %v303 = vadd.f32 %v109, %v302
  %v304 = vpop.f32.mrb[0].mxu0
  %v305 = vpop.f32.mrb[0].mxu0
  %v306 = vadd.f32 %v114, %v305
  %v307 = vpop.f32.mrb[0].mxu0
  %308 = vmatprep.mubr.bf16.mxu0 0
  %309 = vmatmul.mubr.bf16.gmra.mrb[0].mxu0 %v140
  %v310 = vpop.f32.mrb[0].mxu0
  %v311 = vadd.f32 %v119, %v310
  %v312 = vpop.f32.mrb[0].mxu0
  %v313 = vpop.f32.mrb[0].mxu0
  %v314 = vadd.f32 %v124, %v313
  %v315 = vpop.f32.mrb[0].mxu0
  %316 = vdwg.mxu0
  %v317 = vmax.f32 %v303, 0.0
  %v318 = vmax.f32 %v306, 0.0
  %v319 = vmax.f32 %v311, 0.0
  %v320 = vmax.f32 %v314, 0.0
  %v321 = vpack.c.bf16 %v318, %v317
  %v322 = vpack.c.bf16 %v320, %v319
  %v325 = vunpack.c.l.b16 %v321
  %v326 = vunpack.c.h.b16 %v321
  %v327 = vunpack.c.l.b16 %v322
  %v328 = vunpack.c.h.b16 %v322
  %v329 = vpack.c.b16 %v325, %v325
  %v330 = vpack.c.b16 %v326, %v326
  %v331 = vpack.c.b16 %v327, %v327
  %v332 = vpack.c.b16 %v328, %v328
  %s337 = scalar_lea.vmem %s5, 16
  %338 = vst [vmem:[%s337] sm:$0xf] %v329
  %339 = vst [vmem:[%s337 + $0x4] sm:$0xf] %v330
  %340 = vst [vmem:[%s337 + $0x8] sm:$0xf] %v331
  %341 = vst [vmem:[%s337 + $0xc] sm:$0xf] %v332
  %v342 = vmax.f32 %v191, %v317
  %v343 = vmax.f32 %v192, %v318
  %v344 = vmax.f32 %v193, %v319
  %v345 = vmax.f32 %v194, %v320
  %s346 = scalar_lea.vmem %s0, 16
  %v347 = vld [vmem:[%s346] sm:$0xf]
  %v348 = vld [vmem:[%s346 + $0x4] sm:$0xf]
  %v351 = vunpack.c.l.b16 %v347
  %v352 = vunpack.c.l.b16 %v348
  %v353 = vpack.c.b16 %v352, %v351
  %355 = vmatprep.subr.bf16.mxu0 0
  %356 = vmatpush1.bf16.msra.mxu0 %v353
  %357 = vmatprep.subr.bf16.mxu0 0
  %358 = vmatpush1.bf16.msra.mxu0 0
  %359 = vmatprep.subr.bf16.mxu0 0
  %360 = vmatpush1.bf16.msra.mxu0 0
  %361 = vmatprep.subr.bf16.mxu0 0
  %362 = vmatpush1.bf16.msra.mxu0 0
  %363 = vmatprep.subr.bf16.mxu0 0
  %364 = vmatpush1.bf16.msra.mxu0 0
  %365 = vmatprep.subr.bf16.mxu0 0
  %366 = vmatpush1.bf16.msra.mxu0 0
  %367 = vmatprep.subr.bf16.mxu0 0
  %368 = vmatpush1.bf16.msra.mxu0 0
  %369 = vmatprep.subr.bf16.mxu0 0
  %370 = vmatpush1.bf16.msra.mxu0 0
  %371 = vmatprep.subr.bf16.mxu0 0
  %372 = vmatpush1.bf16.msra.mxu0 0
  %373 = vmatprep.subr.bf16.mxu0 0
  %374 = vmatpush1.bf16.msra.mxu0 0
  %375 = vmatprep.subr.bf16.mxu0 0
  %376 = vmatpush1.bf16.msra.mxu0 0
  %377 = vmatprep.subr.bf16.mxu0 0
  %378 = vmatpush1.bf16.msra.mxu0 0
  %379 = vmatprep.subr.bf16.mxu0 0
  %380 = vmatpush1.bf16.msra.mxu0 0
  %381 = vmatprep.subr.bf16.mxu0 0
  %382 = vmatpush1.bf16.msra.mxu0 0
  %383 = vmatprep.subr.bf16.mxu0 0
  %384 = vmatpush1.bf16.msra.mxu0 0
  %385 = vmatprep.subr.bf16.mxu0 0
  %386 = vmatpush1.bf16.msra.mxu0 0
  %387 = vmatprep.mubr.bf16.mxu0 0
  %388 = vmatmul.mubr.bf16.gmra.mrb[0].mxu0 %v60
  %v389 = vpop.f32.mrb[0].mxu0
  %v390 = vadd.f32 %v40, %v389
  %v391 = vpop.f32.mrb[0].mxu0
  %v392 = vpop.f32.mrb[0].mxu0
  %v393 = vadd.f32 %v45, %v392
  %v394 = vpop.f32.mrb[0].mxu0
  %395 = vdwg.mxu0
  %v396 = vmax.f32 %v390, 0.0
  %v397 = vmax.f32 %v393, 0.0
  %v398 = vpack.c.bf16 %v397, %v396
  %399 = vmatprep.subr.bf16.mxu0 0
  %400 = vmatpush1.bf16.msra.mxu0 %v398
  %401 = vmatprep.subr.bf16.mxu0 0
  %402 = vmatpush1.bf16.msra.mxu0 0
  %403 = vmatprep.subr.bf16.mxu0 0
  %404 = vmatpush1.bf16.msra.mxu0 0
  %405 = vmatprep.subr.bf16.mxu0 0
  %406 = vmatpush1.bf16.msra.mxu0 0
  %407 = vmatprep.subr.bf16.mxu0 0
  %408 = vmatpush1.bf16.msra.mxu0 0
  %409 = vmatprep.subr.bf16.mxu0 0
  %410 = vmatpush1.bf16.msra.mxu0 0
  %411 = vmatprep.subr.bf16.mxu0 0
  %412 = vmatpush1.bf16.msra.mxu0 0
  %413 = vmatprep.subr.bf16.mxu0 0
  %414 = vmatpush1.bf16.msra.mxu0 0
  %415 = vmatprep.subr.bf16.mxu0 0
  %416 = vmatpush1.bf16.msra.mxu0 0
  %417 = vmatprep.subr.bf16.mxu0 0
  %418 = vmatpush1.bf16.msra.mxu0 0
  %419 = vmatprep.subr.bf16.mxu0 0
  %420 = vmatpush1.bf16.msra.mxu0 0
  %421 = vmatprep.subr.bf16.mxu0 0
  %422 = vmatpush1.bf16.msra.mxu0 0
  %423 = vmatprep.subr.bf16.mxu0 0
  %424 = vmatpush1.bf16.msra.mxu0 0
  %425 = vmatprep.subr.bf16.mxu0 0
  %426 = vmatpush1.bf16.msra.mxu0 0
  %427 = vmatprep.subr.bf16.mxu0 0
  %428 = vmatpush1.bf16.msra.mxu0 0
  %429 = vmatprep.subr.bf16.mxu0 0
  %430 = vmatpush1.bf16.msra.mxu0 0
  %431 = vmatprep.mubr.bf16.mxu0 0
  %432 = vmatmul.mubr.bf16.gmra.mrb[0].mxu0 %v137
  %v433 = vpop.f32.mrb[0].mxu0
  %v434 = vadd.f32 %v109, %v433
  %v435 = vpop.f32.mrb[0].mxu0
  %v436 = vpop.f32.mrb[0].mxu0
  %v437 = vadd.f32 %v114, %v436
  %v438 = vpop.f32.mrb[0].mxu0
  %439 = vmatprep.mubr.bf16.mxu0 0
  %440 = vmatmul.mubr.bf16.gmra.mrb[0].mxu0 %v140
  %v441 = vpop.f32.mrb[0].mxu0
  %v442 = vadd.f32 %v119, %v441
  %v443 = vpop.f32.mrb[0].mxu0
  %v444 = vpop.f32.mrb[0].mxu0
  %v445 = vadd.f32 %v124, %v444
  %v446 = vpop.f32.mrb[0].mxu0
  %447 = vdwg.mxu0
  %v448 = vmax.f32 %v434, 0.0
  %v449 = vmax.f32 %v437, 0.0
  %v450 = vmax.f32 %v442, 0.0
  %v451 = vmax.f32 %v445, 0.0
  %v452 = vpack.c.bf16 %v449, %v448
  %v453 = vpack.c.bf16 %v451, %v450
  %v456 = vunpack.c.l.b16 %v452
  %v457 = vunpack.c.h.b16 %v452
  %v458 = vunpack.c.l.b16 %v453
  %v459 = vunpack.c.h.b16 %v453
  %v460 = vpack.c.b16 %v456, %v456
  %v461 = vpack.c.b16 %v457, %v457
  %v462 = vpack.c.b16 %v458, %v458
  %v463 = vpack.c.b16 %v459, %v459
  %s468 = scalar_lea.vmem %s5, 32
  %469 = vst [vmem:[%s468] sm:$0xf] %v460
  %470 = vst [vmem:[%s468 + $0x4] sm:$0xf] %v461
  %471 = vst [vmem:[%s468 + $0x8] sm:$0xf] %v462
  %472 = vst [vmem:[%s468 + $0xc] sm:$0xf] %v463
  %v473 = vmax.f32 %v342, %v448
  %v474 = vmax.f32 %v343, %v449
  %v475 = vmax.f32 %v344, %v450
  %v476 = vmax.f32 %v345, %v451
  %s477 = scalar_lea.vmem %s0, 24
  %v478 = vld [vmem:[%s477] sm:$0xf]
  %v479 = vld [vmem:[%s477 + $0x4] sm:$0xf]
  %v482 = vunpack.c.l.b16 %v478
  %v483 = vunpack.c.l.b16 %v479
  %v484 = vpack.c.b16 %v483, %v482
  %486 = vmatprep.subr.bf16.mxu0 0
  %487 = vmatpush1.bf16.msra.mxu0 %v484
  %488 = vmatprep.subr.bf16.mxu0 0
  %489 = vmatpush1.bf16.msra.mxu0 0
  %490 = vmatprep.subr.bf16.mxu0 0
  %491 = vmatpush1.bf16.msra.mxu0 0
  %492 = vmatprep.subr.bf16.mxu0 0
  %493 = vmatpush1.bf16.msra.mxu0 0
  %494 = vmatprep.subr.bf16.mxu0 0
  %495 = vmatpush1.bf16.msra.mxu0 0
  %496 = vmatprep.subr.bf16.mxu0 0
  %497 = vmatpush1.bf16.msra.mxu0 0
  %498 = vmatprep.subr.bf16.mxu0 0
  %499 = vmatpush1.bf16.msra.mxu0 0
  %500 = vmatprep.subr.bf16.mxu0 0
  %501 = vmatpush1.bf16.msra.mxu0 0
  %502 = vmatprep.subr.bf16.mxu0 0
  %503 = vmatpush1.bf16.msra.mxu0 0
  %504 = vmatprep.subr.bf16.mxu0 0
  %505 = vmatpush1.bf16.msra.mxu0 0
  %506 = vmatprep.subr.bf16.mxu0 0
  %507 = vmatpush1.bf16.msra.mxu0 0
  %508 = vmatprep.subr.bf16.mxu0 0
  %509 = vmatpush1.bf16.msra.mxu0 0
  %510 = vmatprep.subr.bf16.mxu0 0
  %511 = vmatpush1.bf16.msra.mxu0 0
  %512 = vmatprep.subr.bf16.mxu0 0
  %513 = vmatpush1.bf16.msra.mxu0 0
  %514 = vmatprep.subr.bf16.mxu0 0
  %515 = vmatpush1.bf16.msra.mxu0 0
  %516 = vmatprep.subr.bf16.mxu0 0
  %517 = vmatpush1.bf16.msra.mxu0 0
  %518 = vmatprep.mubr.bf16.mxu0 0
  %519 = vmatmul.mubr.bf16.gmra.mrb[0].mxu0 %v60
  %v520 = vpop.f32.mrb[0].mxu0
  %v521 = vadd.f32 %v40, %v520
  %v522 = vpop.f32.mrb[0].mxu0
  %v523 = vpop.f32.mrb[0].mxu0
  %v524 = vadd.f32 %v45, %v523
  %v525 = vpop.f32.mrb[0].mxu0
  %526 = vdwg.mxu0
  %v527 = vmax.f32 %v521, 0.0
  %v528 = vmax.f32 %v524, 0.0
  %v529 = vpack.c.bf16 %v528, %v527
  %530 = vmatprep.subr.bf16.mxu0 0
  %531 = vmatpush1.bf16.msra.mxu0 %v529
  %532 = vmatprep.subr.bf16.mxu0 0
  %533 = vmatpush1.bf16.msra.mxu0 0
  %534 = vmatprep.subr.bf16.mxu0 0
  %535 = vmatpush1.bf16.msra.mxu0 0
  %536 = vmatprep.subr.bf16.mxu0 0
  %537 = vmatpush1.bf16.msra.mxu0 0
  %538 = vmatprep.subr.bf16.mxu0 0
  %539 = vmatpush1.bf16.msra.mxu0 0
  %540 = vmatprep.subr.bf16.mxu0 0
  %541 = vmatpush1.bf16.msra.mxu0 0
  %542 = vmatprep.subr.bf16.mxu0 0
  %543 = vmatpush1.bf16.msra.mxu0 0
  %544 = vmatprep.subr.bf16.mxu0 0
  %545 = vmatpush1.bf16.msra.mxu0 0
  %546 = vmatprep.subr.bf16.mxu0 0
  %547 = vmatpush1.bf16.msra.mxu0 0
  %548 = vmatprep.subr.bf16.mxu0 0
  %549 = vmatpush1.bf16.msra.mxu0 0
  %550 = vmatprep.subr.bf16.mxu0 0
  %551 = vmatpush1.bf16.msra.mxu0 0
  %552 = vmatprep.subr.bf16.mxu0 0
  %553 = vmatpush1.bf16.msra.mxu0 0
  %554 = vmatprep.subr.bf16.mxu0 0
  %555 = vmatpush1.bf16.msra.mxu0 0
  %556 = vmatprep.subr.bf16.mxu0 0
  %557 = vmatpush1.bf16.msra.mxu0 0
  %558 = vmatprep.subr.bf16.mxu0 0
  %559 = vmatpush1.bf16.msra.mxu0 0
  %560 = vmatprep.subr.bf16.mxu0 0
  %561 = vmatpush1.bf16.msra.mxu0 0
  %562 = vmatprep.mubr.bf16.mxu0 0
  %563 = vmatmul.mubr.bf16.gmra.mrb[0].mxu0 %v137
  %v564 = vpop.f32.mrb[0].mxu0
  %v565 = vadd.f32 %v109, %v564
  %v566 = vpop.f32.mrb[0].mxu0
  %v567 = vpop.f32.mrb[0].mxu0
  %v568 = vadd.f32 %v114, %v567
  %v569 = vpop.f32.mrb[0].mxu0
  %570 = vmatprep.mubr.bf16.mxu0 0
  %571 = vmatmul.mubr.bf16.gmra.mrb[0].mxu0 %v140
  %v572 = vpop.f32.mrb[0].mxu0
  %v573 = vadd.f32 %v119, %v572
  %v574 = vpop.f32.mrb[0].mxu0
  %v575 = vpop.f32.mrb[0].mxu0
  %v576 = vadd.f32 %v124, %v575
  %v577 = vpop.f32.mrb[0].mxu0
  %578 = vdwg.mxu0
  %v579 = vmax.f32 %v565, 0.0
  %v580 = vmax.f32 %v568, 0.0
  %v581 = vmax.f32 %v573, 0.0
  %v582 = vmax.f32 %v576, 0.0
  %v583 = vpack.c.bf16 %v580, %v579
  %v584 = vpack.c.bf16 %v582, %v581
  %v587 = vunpack.c.l.b16 %v583
  %v588 = vunpack.c.h.b16 %v583
  %v589 = vunpack.c.l.b16 %v584
  %v590 = vunpack.c.h.b16 %v584
  %v591 = vpack.c.b16 %v587, %v587
  %v592 = vpack.c.b16 %v588, %v588
  %v593 = vpack.c.b16 %v589, %v589
  %v594 = vpack.c.b16 %v590, %v590
  %s599 = scalar_lea.vmem %s5, 48
  %600 = vst [vmem:[%s599] sm:$0xf] %v591
  %601 = vst [vmem:[%s599 + $0x4] sm:$0xf] %v592
  %602 = vst [vmem:[%s599 + $0x8] sm:$0xf] %v593
  %603 = vst [vmem:[%s599 + $0xc] sm:$0xf] %v594
  %v604 = vmax.f32 %v473, %v579
  %v605 = vmax.f32 %v474, %v580
  %v606 = vmax.f32 %v475, %v581
  %v607 = vmax.f32 %v476, %v582
  %p608 = scmp.eq.s32.totalorder 0, 0
  // Predicated region
  $region22: #{a_call__.2} parent=0 // pred_check
    %p609 = pneg %p608
  $region23: #{a_call__.2} parent=0 // pred_check_branch
    %611 = sbr.rel (%p609) target = $region25
  $region24: #{a_call__.2} parent=0 // pred_region
    %612 = vst [vmem:[%s6] sm:$0xff] %v604
    %613 = vst [vmem:[%s6 + $0x8] sm:$0xff] %v605
    %614 = vst [vmem:[%s6 + $0x10] sm:$0xff] %v606
    %615 = vst [vmem:[%s6 + $0x18] sm:$0xff] %v607
  $region25: #{a_call__.2} parent=0 // pred_fallthru
    _
  %p616 = scmp.ne.s32.totalorder 0, 0
  // Predicated region
  $region26: #{a_call__.2} parent=0 // pred_check
    %p617 = pneg %p616
  $region27: #{a_call__.2} parent=0 // pred_check_branch
    %619 = sbr.rel (%p617) target = $region29
  $region28: #{a_call__.2} parent=0 // pred_region
    %v620 = vld [vmem:[%s6] sm:$0xff]
    %v621 = vld [vmem:[%s6 + $0x8] sm:$0xff]
    %v622 = vld [vmem:[%s6 + $0x10] sm:$0xff]
    %v623 = vld [vmem:[%s6 + $0x18] sm:$0xff]
    %v624 = vmax.f32 %v620, %v604
    %v625 = vmax.f32 %v621, %v605
    %v626 = vmax.f32 %v622, %v606
    %v627 = vmax.f32 %v623, %v607
    %628 = vst [vmem:[%s6] sm:$0xff] %v624
    %629 = vst [vmem:[%s6 + $0x8] sm:$0xff] %v625
    %630 = vst [vmem:[%s6 + $0x10] sm:$0xff] %v626
    %631 = vst [vmem:[%s6 + $0x18] sm:$0xff] %v627
  $region29: #{a_call__.2} parent=0 // pred_fallthru
    _
  // Predicated region
  $region30: #{a_call__.2} parent=0 // pred_check
    _
  $region31: #{a_call__.2} parent=0 // pred_check_branch
    %633 = sbr.rel (0) target = $region33
  $region32: #{a_call__.2} parent=0 // pred_region
    _
  $region33: #{a_call__.2} parent=0 // pred_fallthru
    _
  // Predicated region
  $region34: #{a_call__.2} parent=0 // pred_check
    _
  $region35: #{a_call__.2} parent=0 // pred_check_branch
    %635 = sbr.rel (0) target = $region37
  $region36: #{a_call__.2} parent=0 // pred_region
    _
  $region37: #{a_call__.2} parent=0 // pred_fallthru
    _
  // Predicated region
  $region38: #{a_call__.2} parent=0 // pred_check
    _
  $region39: #{a_call__.2} parent=0 // pred_check_branch
    %637 = sbr.rel (0) target = $region41
  $region40: #{a_call__.2} parent=0 // pred_region
    _
  $region41: #{a_call__.2} parent=0 // pred_fallthru
    _
  // Predicated region
  $region42: #{a_call__.2} parent=0 // pred_check
    _
  $region43: #{a_call__.2} parent=0 // pred_check_branch
    %639 = sbr.rel (0) target = $region45
  $region44: #{a_call__.2} parent=0 // pred_region
    _
  $region45: #{a_call__.2} parent=0 // pred_fallthru
    _

// kernel: a_call__.3
$region0: #{a_call__.3}
  #allocation0 [shape = 'u32[]', space=smem, size = 0x4, offset = 0x4, fixed_abs, tag = 'smem constant byte address 0x4 - core index']
  #allocation1 [shape = 'u32[144,128]{1,0:T(1,128)}', space=vmem, size = 0x12000, scoped, tag = 'internal scratch']
  %s0 = inlined_call_operand.vmem [shape: bf16[8,16,128], index: 0, kind: input, shape index: {}]
  %s1 = inlined_call_operand.vmem [shape: bf16[16,16], index: 1, kind: input, shape index: {}]
  %s2 = inlined_call_operand.vmem [shape: f32[16,1], index: 2, kind: input, shape index: {}]
  %s3 = inlined_call_operand.vmem [shape: bf16[32,16], index: 3, kind: input, shape index: {}]
  %s4 = inlined_call_operand.vmem [shape: f32[32,1], index: 4, kind: input, shape index: {}]
  %s5 = inlined_call_operand.vmem [shape: bf16[8,32,128], index: 5, kind: output, shape index: {0}]
  %s6 = inlined_call_operand.vmem [shape: f32[32,128], index: 6, kind: output, shape index: {1}]
  %7 = xla_tuple %s5, %s6
  %s8 = sld [smem:[#allocation0]]
  $region69: #{a_call__.3} parent=0
    _
  %s10 = ssub.s32 1, %s8
  %s11 = scalar_select 0, %s10, %s8
  loop: start=0, step=1, limit=4
  $region2: #{a_call__.3} parent=0 // loop_pre_header
    _
  $region3: #{a_call__.3} parent=0 // loop_header
    %s13 = sphi 0, %s17
    %p14 = scmp.ge.s32.totalorder %s13, 4
    %s20 = sphi 0, %s32
    %s21 = sphi 0, %s28
    %s22 = sphi 0, %s20
    %s23 = sphi 0, %s21
    %s24 = sphi 0, %s22
    %s25 = sphi 0, %s23
    %s37 = sphi 0, %s39
    %s40 = sphi 0, %s37
    %s41 = sphi 0, %s40
    %s57 = sphi 0, %s41
    %s61 = sphi 0, %s61
    %s63 = sphi 0, %s61
    %s64 = sphi 0, %s63
    %s78 = sphi 0, %s64
    %s82 = sphi 0, %s82
    %s84 = sphi 0, %s82
    %s85 = sphi 0, %s84
    %s99 = sphi 0, %s85
    %s103 = sphi 0, %s103
    %s105 = sphi 0, %s103
    %s106 = sphi 0, %s105
    %s120 = sphi 0, %s106
    %s124 = sphi 0, %s124
    %s126 = sphi 0, %s124
    %s127 = sphi 0, %s126
    %s141 = sphi 0, %s127
    %s149 = sphi 0, %s151
    %s152 = sphi 0, %s149
    %s153 = sphi 0, %s152
    %s169 = sphi 0, %s153
    %s175 = sphi 0, %s177
    %s178 = sphi 0, %s175
    %s179 = sphi 0, %s178
    %s195 = sphi 0, %s179
  $region4: #{a_call__.3} parent=0 // loop_header_branch
    %16 = sbr.rel (%p14) target = $region8
  $region5: #{a_call__.3} parent=0 // loop_body
    %s18 = ssub.s32 %s13, 1
    %s19 = ssub.s32 %s13, 2
    %s26 = sadd.s32 1, %s21
    %p27 = scmp.ge.s32.totalorder %s26, 2
    %s28 = scalar_select %p27, 0, %s26
    %s29 = sadd.s32 1, %s20
    %s30 = scalar_select %p27, %s29, %s20
    %p31 = scmp.ge.s32.totalorder %s30, 1
    %s32 = scalar_select %p31, 0, %s30
    %s33 = ssub.s32 %s21, %s28
    %s34 = ssub.s32 %s20, %s32
    %s35 = sor.u32 %s33, %s34
    %p36 = scmp.eq.s32.totalorder %s35, 0
    %s38 = sadd.s32 %s37, 1
    %s39 = scalar_select %p36, %s37, %s38
    %p42 = pneg %p36
    %p43 = scmp.eq.s32.totalorder %s13, 1
    %p44 = por %p42, %p43
    %p45 = scmp.ne.s32.totalorder %s37, %s40
    %p46 = scmp.eq.s32.totalorder %s13, 0
    %p47 = por %p45, %p46
    %p48 = scmp.ne.s32.totalorder %s37, %s40
    %p49 = scmp.eq.s32.totalorder %s18, 1
    %p50 = por %p48, %p49
    %p51 = scmp.ne.s32.totalorder %s40, %s41
    %p52 = scmp.eq.s32.totalorder %s18, 0
    %p53 = por %p51, %p52
    %p54 = scmp.ne.s32.totalorder %s40, %s41
    %p55 = scmp.eq.s32.totalorder %s19, 1
    %p56 = por %p54, %p55
    %p58 = scmp.ne.s32.totalorder %s41, %s57
    %p59 = scmp.eq.s32.totalorder %s19, 0
    %p60 = por %p58, %p59
    %s62 = sadd.s32 %s61, 1
    %p65 = scmp.eq.s32.totalorder %s13, 1
    %p66 = scmp.ne.s32.totalorder %s61, %s63
    %p67 = scmp.eq.s32.totalorder %s13, 0
    %p68 = por %p66, %p67
    %p69 = scmp.ne.s32.totalorder %s61, %s63
    %p70 = scmp.eq.s32.totalorder %s18, 1
    %p71 = por %p69, %p70
    %p72 = scmp.ne.s32.totalorder %s63, %s64
    %p73 = scmp.eq.s32.totalorder %s18, 0
    %p74 = por %p72, %p73
    %p75 = scmp.ne.s32.totalorder %s63, %s64
    %p76 = scmp.eq.s32.totalorder %s19, 1
    %p77 = por %p75, %p76
    %p79 = scmp.ne.s32.totalorder %s64, %s78
    %p80 = scmp.eq.s32.totalorder %s19, 0
    %p81 = por %p79, %p80
    %s83 = sadd.s32 %s82, 1
    %p86 = scmp.eq.s32.totalorder %s13, 1
    %p87 = scmp.ne.s32.totalorder %s82, %s84
    %p88 = scmp.eq.s32.totalorder %s13, 0
    %p89 = por %p87, %p88
    %p90 = scmp.ne.s32.totalorder %s82, %s84
    %p91 = scmp.eq.s32.totalorder %s18, 1
    %p92 = por %p90, %p91
    %p93 = scmp.ne.s32.totalorder %s84, %s85
    %p94 = scmp.eq.s32.totalorder %s18, 0
    %p95 = por %p93, %p94
    %p96 = scmp.ne.s32.totalorder %s84, %s85
    %p97 = scmp.eq.s32.totalorder %s19, 1
    %p98 = por %p96, %p97
    %p100 = scmp.ne.s32.totalorder %s85, %s99
    %p101 = scmp.eq.s32.totalorder %s19, 0
    %p102 = por %p100, %p101
    %s104 = sadd.s32 %s103, 1
    %p107 = scmp.eq.s32.totalorder %s13, 1
    %p108 = scmp.ne.s32.totalorder %s103, %s105
    %p109 = scmp.eq.s32.totalorder %s13, 0
    %p110 = por %p108, %p109
    %p111 = scmp.ne.s32.totalorder %s103, %s105
    %p112 = scmp.eq.s32.totalorder %s18, 1
    %p113 = por %p111, %p112
    %p114 = scmp.ne.s32.totalorder %s105, %s106
    %p115 = scmp.eq.s32.totalorder %s18, 0
    %p116 = por %p114, %p115
    %p117 = scmp.ne.s32.totalorder %s105, %s106
    %p118 = scmp.eq.s32.totalorder %s19, 1
    %p119 = por %p117, %p118
    %p121 = scmp.ne.s32.totalorder %s106, %s120
    %p122 = scmp.eq.s32.totalorder %s19, 0
    %p123 = por %p121, %p122
    %s125 = sadd.s32 %s124, 1
    %p128 = scmp.eq.s32.totalorder %s13, 1
    %p129 = scmp.ne.s32.totalorder %s124, %s126
    %p130 = scmp.eq.s32.totalorder %s13, 0
    %p131 = por %p129, %p130
    %p132 = scmp.ne.s32.totalorder %s124, %s126
    %p133 = scmp.eq.s32.totalorder %s18, 1
    %p134 = por %p132, %p133
    %p135 = scmp.ne.s32.totalorder %s126, %s127
    %p136 = scmp.eq.s32.totalorder %s18, 0
    %p137 = por %p135, %p136
    %p138 = scmp.ne.s32.totalorder %s126, %s127
    %p139 = scmp.eq.s32.totalorder %s19, 1
    %p140 = por %p138, %p139
    %p142 = scmp.ne.s32.totalorder %s127, %s141
    %p143 = scmp.eq.s32.totalorder %s19, 0
    %p144 = por %p142, %p143
    %s145 = ssub.s32 %s21, %s28
    %s146 = ssub.s32 %s20, %s32
    %s147 = sor.u32 %s145, %s146
    %p148 = scmp.eq.s32.totalorder %s147, 0
    %s150 = sadd.s32 %s149, 1
    %s151 = scalar_select %p148, %s149, %s150
    %p154 = pneg %p148
    %p155 = scmp.eq.s32.totalorder %s13, 1
    %p156 = por %p154, %p155
    %p157 = scmp.ne.s32.totalorder %s149, %s152
    %p158 = scmp.eq.s32.totalorder %s13, 0
    %p159 = por %p157, %p158
    %p160 = scmp.ne.s32.totalorder %s149, %s152
    %p161 = scmp.eq.s32.totalorder %s18, 1
    %p162 = por %p160, %p161
    %p163 = scmp.ne.s32.totalorder %s152, %s153
    %p164 = scmp.eq.s32.totalorder %s18, 0
    %p165 = por %p163, %p164
    %p166 = scmp.ne.s32.totalorder %s152, %s153
    %p167 = scmp.eq.s32.totalorder %s19, 1
    %p168 = por %p166, %p167
    %p170 = scmp.ne.s32.totalorder %s153, %s169
    %p171 = scmp.eq.s32.totalorder %s19, 0
    %p172 = por %p170, %p171
    %s173 = ssub.s32 %s20, %s32
    %p174 = scmp.eq.s32.totalorder %s173, 0
    %s176 = sadd.s32 %s175, 1
    %s177 = scalar_select %p174, %s175, %s176
    %p180 = pneg %p174
    %p181 = scmp.eq.s32.totalorder %s13, 1
    %p182 = por %p180, %p181
    %p183 = scmp.ne.s32.totalorder %s175, %s178
    %p184 = scmp.eq.s32.totalorder %s13, 0
    %p185 = por %p183, %p184
    %p186 = scmp.ne.s32.totalorder %s175, %s178
    %p187 = scmp.eq.s32.totalorder %s18, 1
    %p188 = por %p186, %p187
    %p189 = scmp.ne.s32.totalorder %s178, %s179
    %p190 = scmp.eq.s32.totalorder %s18, 0
    %p191 = por %p189, %p190
    %p192 = scmp.ne.s32.totalorder %s178, %s179
    %p193 = scmp.eq.s32.totalorder %s19, 1
    %p194 = por %p192, %p193
    %p196 = scmp.ne.s32.totalorder %s179, %s195
    %p197 = scmp.eq.s32.totalorder %s19, 0
    %p198 = por %p196, %p197
    %p199 = scmp.le.s32.totalorder 1, %s13
    %p200 = scmp.lt.s32.totalorder %s13, 3
    %p201 = pnand %p199, %p200
    %p202 = pneg %p201
    // Predicated region
    $region9: #{a_call__.3} parent=5 // pred_check
      _
    $region10: #{a_call__.3} parent=5 // pred_check_branch
      %204 = sbr.rel (%p201) target = $region12
    $region11: #{a_call__.3} parent=5 // pred_region
      %s205 = ssub.s32 %s13, 1
      // Predicated region
      $region13: #{a_call__.3} parent=11 // pred_check
        %p206 = pneg %p74
      $region14: #{a_call__.3} parent=11 // pred_check_branch
        %208 = sbr.rel (%p206) target = $region16
      $region15: #{a_call__.3} parent=11 // pred_region
        _
      $region16: #{a_call__.3} parent=11 // pred_fallthru
        _
      // Predicated region
      $region17: #{a_call__.3} parent=11 // pred_check
        %p209 = pneg %p95
      $region18: #{a_call__.3} parent=11 // pred_check_branch
        %211 = sbr.rel (%p209) target = $region20
      $region19: #{a_call__.3} parent=11 // pred_region
        _
      $region20: #{a_call__.3} parent=11 // pred_fallthru
        _
      // Predicated region
      $region21: #{a_call__.3} parent=11 // pred_check
        %p212 = pneg %p116
      $region22: #{a_call__.3} parent=11 // pred_check_branch
        %214 = sbr.rel (%p212) target = $region24
      $region23: #{a_call__.3} parent=11 // pred_region
        _
      $region24: #{a_call__.3} parent=11 // pred_fallthru
        _
      // Predicated region
      $region25: #{a_call__.3} parent=11 // pred_check
        %p215 = pneg %p137
      $region26: #{a_call__.3} parent=11 // pred_check_branch
        %217 = sbr.rel (%p215) target = $region28
      $region27: #{a_call__.3} parent=11 // pred_region
        _
      $region28: #{a_call__.3} parent=11 // pred_fallthru
        _
    $region12: #{a_call__.3} parent=5 // pred_fallthru
      _
    %p218 = scmp.lt.s32.totalorder %s13, 2
    // Predicated region
    $region29: #{a_call__.3} parent=5 // pred_check
      %p219 = pneg %p218
    $region30: #{a_call__.3} parent=5 // pred_check_branch
      %221 = sbr.rel (%p219) target = $region32
    $region31: #{a_call__.3} parent=5 // pred_region
      // Predicated region
      $region33: #{a_call__.3} parent=31 // pred_check
        %p222 = pneg %p47
      $region34: #{a_call__.3} parent=31 // pred_check_branch
        %224 = sbr.rel (%p222) target = $region36
      $region35: #{a_call__.3} parent=31 // pred_region
        %s225 = smul.u32 4, %s21
        %p226 = scmp.lt.s32.totalorder %s225, 7
        %s227 = scalar_select %p226, %s225, 7
        %p228 = scmp.lt.s32.totalorder %s20, 0
        %s229 = scalar_select %p228, %s20, 0
        %s230 = smul.addr %s227, 2
        %s231 = sadd.s32 %s229, %s230
        %s232 = smul.addr %s231, 4
        %s233 = scalar_lea.vmem %s0, %s232
        %s234 = smul.u32 4, %s21
      $region36: #{a_call__.3} parent=31 // pred_fallthru
        _
    $region32: #{a_call__.3} parent=5 // pred_fallthru
      _
    %p235 = scmp.le.s32.totalorder 1, %s13
    %p236 = scmp.lt.s32.totalorder %s13, 3
    %p237 = pnand %p235, %p236
    %p238 = pneg %p237
    // Predicated region
    $region37: #{a_call__.3} parent=5 // pred_check
      _
    $region38: #{a_call__.3} parent=5 // pred_check_branch
      %240 = sbr.rel (%p237) target = $region40
    $region39: #{a_call__.3} parent=5 // pred_region
      %s241 = ssub.s32 %s13, 1
      %s242 = smul.u32 4, %s23
      %p243 = scmp.lt.s32.totalorder %s242, 7
      %s244 = scalar_select %p243, %s242, 7
      %p245 = scmp.lt.s32.totalorder %s22, 0
      %s246 = scalar_select %p245, %s22, 0
      %s247 = smul.addr %s244, 2
      %s248 = sadd.s32 %s246, %s247
      %s249 = smul.addr %s248, 4
      %s250 = scalar_lea.vmem %s0, %s249
      %p251 = pneg %p53
      %p252 = pneg %p50
      %p253 = pneg %p74
      %p254 = pneg %p71
      %p255 = pneg %p95
      %p256 = pneg %p92
      %p257 = pneg %p116
      %p258 = pneg %p113
      %p259 = pneg %p137
      %p260 = pneg %p134
      %p261 = pneg %p165
      %p262 = pneg %p162
      %s263 = smul.u32 4, %s23
      %p264 = scmp.lt.s32.totalorder %s263, 7
      %s265 = scalar_select %p264, %s263, 7
      %p266 = scmp.lt.s32.totalorder %s22, 0
      %s267 = scalar_select %p266, %s22, 0
      %s268 = smul.addr %s265, 4
      %s269 = sadd.s32 %s267, %s268
      %s270 = smul.addr %s269, 4
      %s271 = scalar_lea.vmem %s5, %s270
      %p272 = pneg %p191
      %p273 = pneg %p188
      %p274 = scmp.lt.s32.totalorder %s22, 0
      %s275 = scalar_select %p274, %s22, 0
      %s276 = smul.addr %s275, 8
      %s277 = scalar_lea.vmem %s6, %s276
      %s278 = smul.u32 4, %s23
      %p279 = scmp.lt.s32.totalorder %s278, 7
      %s280 = scalar_select %p279, %s278, 7
      %p281 = scmp.lt.s32.totalorder %s22, 0
      %s282 = scalar_select %p281, %s22, 0
      %s283 = smul.addr %s280, 2
      %s284 = sadd.s32 %s282, %s283
      %s285 = smul.addr %s284, 4
      %s286 = scalar_lea.vmem %s0, %s285
      %s287 = smul.u32 4, %s23
      %s288 = smul.u32 4, %s23
      %p289 = scmp.lt.s32.totalorder %s288, 7
      %s290 = scalar_select %p289, %s288, 7
      %p291 = scmp.lt.s32.totalorder %s22, 0
      %s292 = scalar_select %p291, %s22, 0
      %s293 = smul.addr %s290, 4
      %s294 = sadd.s32 %s292, %s293
      %s295 = smul.addr %s294, 4
      %s296 = scalar_lea.vmem %s5, %s295
      %s297 = smul.u32 4, %s23
      %p298 = scmp.lt.s32.totalorder %s22, 0
      %s299 = scalar_select %p298, %s22, 0
      %s300 = smul.addr %s299, 8
      %s301 = scalar_lea.vmem %s6, %s300
      %v303 = vld [vmem:[%s1] sm:$0xf]
      %v304 = vld [vmem:[%s1 + $0x4] sm:$0xf]
      %v305 = vld [vmem:[%s3] sm:$0xf]
      %v306 = vld [vmem:[%s3 + $0x4] sm:$0xf]
      %v307 = vld [vmem:[%s3 + $0x8] sm:$0xf]
      %v308 = vld [vmem:[%s3 + $0xc] sm:$0xf]
      %v309 = vld [vmem:[%s2] sm:$0xff]
      %v310 = vld [vmem:[%s2 + $0x8] sm:$0xff]
      %v311 = vld [vmem:[%s4] sm:$0xff]
      %v312 = vld [vmem:[%s4 + $0x8] sm:$0xff]
      %v313 = vld [vmem:[%s4 + $0x10] sm:$0xff]
      %v314 = vld [vmem:[%s4 + $0x18] sm:$0xff]
      %v315 = vld [vmem:[%s286] sm:$0xf]
      %v316 = vld [vmem:[%s286 + $0x4] sm:$0xf]
      %318 = vset.pattern.permute.xlu0 0
      %319 = vperm.xlu0 %318, %v309
      %v320 = vpop.permute.xlu0 %319
      %323 = vset.pattern.permute.xlu0 0
      %324 = vperm.xlu0 %323, %v310
      %v325 = vpop.permute.xlu0 %324
      %v329 = vunpack.c.l.b16 %v303
      %v330 = vunpack.c.l.b16 %v304
      %v331 = vpack.c.b16 %v330, %v329
      %v334 = vunpack.c.l.b16 %v315
      %v335 = vunpack.c.l.b16 %v316
      %v336 = vpack.c.b16 %v335, %v334
      %vm338 = vcmask 130048
      %v340 = vsel %vm338, %v331, 0
      %342 = vmatprep.subr.bf16.mxu0 0
      %343 = vmatpush1.bf16.msra.mxu0 %v336
      %344 = vmatprep.subr.bf16.mxu0 0
      %345 = vmatpush1.bf16.msra.mxu0 0
      %346 = vmatprep.subr.bf16.mxu0 0
      %347 = vmatpush1.bf16.msra.mxu0 0
      %348 = vmatprep.subr.bf16.mxu0 0
      %349 = vmatpush1.bf16.msra.mxu0 0
      %350 = vmatprep.subr.bf16.mxu0 0
      %351 = vmatpush1.bf16.msra.mxu0 0
      %352 = vmatprep.subr.bf16.mxu0 0
      %353 = vmatpush1.bf16.msra.mxu0 0
      %354 = vmatprep.subr.bf16.mxu0 0
      %355 = vmatpush1.bf16.msra.mxu0 0
      %356 = vmatprep.subr.bf16.mxu0 0
      %357 = vmatpush1.bf16.msra.mxu0 0
      %358 = vmatprep.subr.bf16.mxu0 0
      %359 = vmatpush1.bf16.msra.mxu0 0
      %360 = vmatprep.subr.bf16.mxu0 0
      %361 = vmatpush1.bf16.msra.mxu0 0
      %362 = vmatprep.subr.bf16.mxu0 0
      %363 = vmatpush1.bf16.msra.mxu0 0
      %364 = vmatprep.subr.bf16.mxu0 0
      %365 = vmatpush1.bf16.msra.mxu0 0
      %366 = vmatprep.subr.bf16.mxu0 0
      %367 = vmatpush1.bf16.msra.mxu0 0
      %368 = vmatprep.subr.bf16.mxu0 0
      %369 = vmatpush1.bf16.msra.mxu0 0
      %370 = vmatprep.subr.bf16.mxu0 0
      %371 = vmatpush1.bf16.msra.mxu0 0
      %372 = vmatprep.subr.bf16.mxu0 0
      %373 = vmatpush1.bf16.msra.mxu0 0
      %374 = vmatprep.mubr.bf16.mxu0 0
      %375 = vmatmul.mubr.bf16.gmra.mrb[0].mxu0 %v340
      %v376 = vpop.f32.mrb[0].mxu0
      %v377 = vadd.f32 %v320, %v376
      %v378 = vpop.f32.mrb[0].mxu0
      %v379 = vpop.f32.mrb[0].mxu0
      %v380 = vadd.f32 %v325, %v379
      %v381 = vpop.f32.mrb[0].mxu0
      %382 = vdwg.mxu0
      %v383 = vmax.f32 %v377, 0.0
      %v384 = vmax.f32 %v380, 0.0
      %v385 = vpack.c.bf16 %v384, %v383
      %387 = vset.pattern.permute.xlu0 0
      %388 = vperm.xlu0 %387, %v311
      %v389 = vpop.permute.xlu0 %388
      %392 = vset.pattern.permute.xlu0 0
      %393 = vperm.xlu0 %392, %v312
      %v394 = vpop.permute.xlu0 %393
      %397 = vset.pattern.permute.xlu0 0
      %398 = vperm.xlu0 %397, %v313
      %v399 = vpop.permute.xlu0 %398
      %402 = vset.pattern.permute.xlu0 0
      %403 = vperm.xlu0 %402, %v314
      %v404 = vpop.permute.xlu0 %403
      %v410 = vunpack.c.l.b16 %v305
      %v411 = vunpack.c.l.b16 %v306
      %v412 = vunpack.c.l.b16 %v307
      %v413 = vunpack.c.l.b16 %v308
      %v414 = vpack.c.b16 %v411, %v410
      %v415 = vpack.c.b16 %v413, %v412
      %v417 = vsel %vm338, %v414, 0
      %v420 = vsel %vm338, %v415, 0
      %422 = vmatprep.subr.bf16.mxu0 0
      %423 = vmatpush1.bf16.msra.mxu0 %v385
      %424 = vmatprep.subr.bf16.mxu0 0
      %425 = vmatpush1.bf16.msra.mxu0 0
      %426 = vmatprep.subr.bf16.mxu0 0
      %427 = vmatpush1.bf16.msra.mxu0 0
      %428 = vmatprep.subr.bf16.mxu0 0
      %429 = vmatpush1.bf16.msra.mxu0 0
      %430 = vmatprep.subr.bf16.mxu0 0
      %431 = vmatpush1.bf16.msra.mxu0 0
      %432 = vmatprep.subr.bf16.mxu0 0
      %433 = vmatpush1.bf16.msra.mxu0 0
      %434 = vmatprep.subr.bf16.mxu0 0
      %435 = vmatpush1.bf16.msra.mxu0 0
      %436 = vmatprep.subr.bf16.mxu0 0
      %437 = vmatpush1.bf16.msra.mxu0 0
      %438 = vmatprep.subr.bf16.mxu0 0
      %439 = vmatpush1.bf16.msra.mxu0 0
      %440 = vmatprep.subr.bf16.mxu0 0
      %441 = vmatpush1.bf16.msra.mxu0 0
      %442 = vmatprep.subr.bf16.mxu0 0
      %443 = vmatpush1.bf16.msra.mxu0 0
      %444 = vmatprep.subr.bf16.mxu0 0
      %445 = vmatpush1.bf16.msra.mxu0 0
      %446 = vmatprep.subr.bf16.mxu0 0
      %447 = vmatpush1.bf16.msra.mxu0 0
      %448 = vmatprep.subr.bf16.mxu0 0
      %449 = vmatpush1.bf16.msra.mxu0 0
      %450 = vmatprep.subr.bf16.mxu0 0
      %451 = vmatpush1.bf16.msra.mxu0 0
      %452 = vmatprep.subr.bf16.mxu0 0
      %453 = vmatpush1.bf16.msra.mxu0 0
      %454 = vmatprep.mubr.bf16.mxu0 0
      %455 = vmatmul.mubr.bf16.gmra.mrb[0].mxu0 %v417
      %v456 = vpop.f32.mrb[0].mxu0
      %v457 = vadd.f32 %v389, %v456
      %v458 = vpop.f32.mrb[0].mxu0
      %v459 = vpop.f32.mrb[0].mxu0
      %v460 = vadd.f32 %v394, %v459
      %v461 = vpop.f32.mrb[0].mxu0
      %462 = vmatprep.mubr.bf16.mxu0 0
      %463 = vmatmul.mubr.bf16.gmra.mrb[0].mxu0 %v420
      %v464 = vpop.f32.mrb[0].mxu0
      %v465 = vadd.f32 %v399, %v464
      %v466 = vpop.f32.mrb[0].mxu0
      %v467 = vpop.f32.mrb[0].mxu0
      %v468 = vadd.f32 %v404, %v467
      %v469 = vpop.f32.mrb[0].mxu0
      %470 = vdwg.mxu0
      %v471 = vmax.f32 %v457, 0.0
      %v472 = vmax.f32 %v460, 0.0
      %v473 = vmax.f32 %v465, 0.0
      %v474 = vmax.f32 %v468, 0.0
      %v475 = vpack.c.bf16 %v472, %v471
      %v476 = vpack.c.bf16 %v474, %v473
      %v479 = vunpack.c.l.b16 %v475
      %v480 = vunpack.c.h.b16 %v475
      %v481 = vunpack.c.l.b16 %v476
      %v482 = vunpack.c.h.b16 %v476
      %v483 = vpack.c.b16 %v479, %v479
      %v484 = vpack.c.b16 %v480, %v480
      %v485 = vpack.c.b16 %v481, %v481
      %v486 = vpack.c.b16 %v482, %v482
      %491 = vst [vmem:[%s296] sm:$0xf] %v483
      %492 = vst [vmem:[%s296 + $0x4] sm:$0xf] %v484
      %493 = vst [vmem:[%s296 + $0x8] sm:$0xf] %v485
      %494 = vst [vmem:[%s296 + $0xc] sm:$0xf] %v486
      %s495 = scalar_lea.vmem %s286, 8
      %v496 = vld [vmem:[%s495] sm:$0xf]
      %v497 = vld [vmem:[%s495 + $0x4] sm:$0xf]
      %v500 = vunpack.c.l.b16 %v496
      %v501 = vunpack.c.l.b16 %v497
      %v502 = vpack.c.b16 %v501, %v500
      %504 = vmatprep.subr.bf16.mxu0 0
      %505 = vmatpush1.bf16.msra.mxu0 %v502
      %506 = vmatprep.subr.bf16.mxu0 0
      %507 = vmatpush1.bf16.msra.mxu0 0
      %508 = vmatprep.subr.bf16.mxu0 0
      %509 = vmatpush1.bf16.msra.mxu0 0
      %510 = vmatprep.subr.bf16.mxu0 0
      %511 = vmatpush1.bf16.msra.mxu0 0
      %512 = vmatprep.subr.bf16.mxu0 0
      %513 = vmatpush1.bf16.msra.mxu0 0
      %514 = vmatprep.subr.bf16.mxu0 0
      %515 = vmatpush1.bf16.msra.mxu0 0
      %516 = vmatprep.subr.bf16.mxu0 0
      %517 = vmatpush1.bf16.msra.mxu0 0
      %518 = vmatprep.subr.bf16.mxu0 0
      %519 = vmatpush1.bf16.msra.mxu0 0
      %520 = vmatprep.subr.bf16.mxu0 0
      %521 = vmatpush1.bf16.msra.mxu0 0
      %522 = vmatprep.subr.bf16.mxu0 0
      %523 = vmatpush1.bf16.msra.mxu0 0
      %524 = vmatprep.subr.bf16.mxu0 0
      %525 = vmatpush1.bf16.msra.mxu0 0
      %526 = vmatprep.subr.bf16.mxu0 0
      %527 = vmatpush1.bf16.msra.mxu0 0
      %528 = vmatprep.subr.bf16.mxu0 0
      %529 = vmatpush1.bf16.msra.mxu0 0
      %530 = vmatprep.subr.bf16.mxu0 0
      %531 = vmatpush1.bf16.msra.mxu0 0
      %532 = vmatprep.subr.bf16.mxu0 0
      %533 = vmatpush1.bf16.msra.mxu0 0
      %534 = vmatprep.subr.bf16.mxu0 0
      %535 = vmatpush1.bf16.msra.mxu0 0
      %536 = vmatprep.mubr.bf16.mxu0 0
      %537 = vmatmul.mubr.bf16.gmra.mrb[0].mxu0 %v340
      %v538 = vpop.f32.mrb[0].mxu0
      %v539 = vadd.f32 %v320, %v538
      %v540 = vpop.f32.mrb[0].mxu0
      %v541 = vpop.f32.mrb[0].mxu0
      %v542 = vadd.f32 %v325, %v541
      %v543 = vpop.f32.mrb[0].mxu0
      %544 = vdwg.mxu0
      %v545 = vmax.f32 %v539, 0.0
      %v546 = vmax.f32 %v542, 0.0
      %v547 = vpack.c.bf16 %v546, %v545
      %548 = vmatprep.subr.bf16.mxu0 0
      %549 = vmatpush1.bf16.msra.mxu0 %v547
      %550 = vmatprep.subr.bf16.mxu0 0
      %551 = vmatpush1.bf16.msra.mxu0 0
      %552 = vmatprep.subr.bf16.mxu0 0
      %553 = vmatpush1.bf16.msra.mxu0 0
      %554 = vmatprep.subr.bf16.mxu0 0
      %555 = vmatpush1.bf16.msra.mxu0 0
      %556 = vmatprep.subr.bf16.mxu0 0
      %557 = vmatpush1.bf16.msra.mxu0 0
      %558 = vmatprep.subr.bf16.mxu0 0
      %559 = vmatpush1.bf16.msra.mxu0 0
      %560 = vmatprep.subr.bf16.mxu0 0
      %561 = vmatpush1.bf16.msra.mxu0 0
      %562 = vmatprep.subr.bf16.mxu0 0
      %563 = vmatpush1.bf16.msra.mxu0 0
      %564 = vmatprep.subr.bf16.mxu0 0
      %565 = vmatpush1.bf16.msra.mxu0 0
      %566 = vmatprep.subr.bf16.mxu0 0
      %567 = vmatpush1.bf16.msra.mxu0 0
      %568 = vmatprep.subr.bf16.mxu0 0
      %569 = vmatpush1.bf16.msra.mxu0 0
      %570 = vmatprep.subr.bf16.mxu0 0
      %571 = vmatpush1.bf16.msra.mxu0 0
      %572 = vmatprep.subr.bf16.mxu0 0
      %573 = vmatpush1.bf16.msra.mxu0 0
      %574 = vmatprep.subr.bf16.mxu0 0
      %575 = vmatpush1.bf16.msra.mxu0 0
      %576 = vmatprep.subr.bf16.mxu0 0
      %577 = vmatpush1.bf16.msra.mxu0 0
      %578 = vmatprep.subr.bf16.mxu0 0
      %579 = vmatpush1.bf16.msra.mxu0 0
      %580 = vmatprep.mubr.bf16.mxu0 0
      %581 = vmatmul.mubr.bf16.gmra.mrb[0].mxu0 %v417
      %v582 = vpop.f32.mrb[0].mxu0
      %v583 = vadd.f32 %v389, %v582
      %v584 = vpop.f32.mrb[0].mxu0
      %v585 = vpop.f32.mrb[0].mxu0
      %v586 = vadd.f32 %v394, %v585
      %v587 = vpop.f32.mrb[0].mxu0
      %588 = vmatprep.mubr.bf16.mxu0 0
      %589 = vmatmul.mubr.bf16.gmra.mrb[0].mxu0 %v420
      %v590 = vpop.f32.mrb[0].mxu0
      %v591 = vadd.f32 %v399, %v590
      %v592 = vpop.f32.mrb[0].mxu0
      %v593 = vpop.f32.mrb[0].mxu0
      %v594 = vadd.f32 %v404, %v593
      %v595 = vpop.f32.mrb[0].mxu0
      %596 = vdwg.mxu0
      %v597 = vmax.f32 %v583, 0.0
      %v598 = vmax.f32 %v586, 0.0
      %v599 = vmax.f32 %v591, 0.0
      %v600 = vmax.f32 %v594, 0.0
      %v601 = vpack.c.bf16 %v598, %v597
      %v602 = vpack.c.bf16 %v600, %v599
      %v605 = vunpack.c.l.b16 %v601
      %v606 = vunpack.c.h.b16 %v601
      %v607 = vunpack.c.l.b16 %v602
      %v608 = vunpack.c.h.b16 %v602
      %v609 = vpack.c.b16 %v605, %v605
      %v610 = vpack.c.b16 %v606, %v606
      %v611 = vpack.c.b16 %v607, %v607
      %v612 = vpack.c.b16 %v608, %v608
      %s617 = scalar_lea.vmem %s296, 16
      %618 = vst [vmem:[%s617] sm:$0xf] %v609
      %619 = vst [vmem:[%s617 + $0x4] sm:$0xf] %v610
      %620 = vst [vmem:[%s617 + $0x8] sm:$0xf] %v611
      %621 = vst [vmem:[%s617 + $0xc] sm:$0xf] %v612
      %v622 = vmax.f32 %v471, %v597
      %v623 = vmax.f32 %v472, %v598
      %v624 = vmax.f32 %v473, %v599
      %v625 = vmax.f32 %v474, %v600
      %s626 = scalar_lea.vmem %s286, 16
      %v627 = vld [vmem:[%s626] sm:$0xf]
      %v628 = vld [vmem:[%s626 + $0x4] sm:$0xf]
      %v631 = vunpack.c.l.b16 %v627
      %v632 = vunpack.c.l.b16 %v628
      %v633 = vpack.c.b16 %v632, %v631
      %635 = vmatprep.subr.bf16.mxu0 0
      %636 = vmatpush1.bf16.msra.mxu0 %v633
      %637 = vmatprep.subr.bf16.mxu0 0
      %638 = vmatpush1.bf16.msra.mxu0 0
      %639 = vmatprep.subr.bf16.mxu0 0
      %640 = vmatpush1.bf16.msra.mxu0 0
      %641 = vmatprep.subr.bf16.mxu0 0
      %642 = vmatpush1.bf16.msra.mxu0 0
      %643 = vmatprep.subr.bf16.mxu0 0
      %644 = vmatpush1.bf16.msra.mxu0 0
      %645 = vmatprep.subr.bf16.mxu0 0
      %646 = vmatpush1.bf16.msra.mxu0 0
      %647 = vmatprep.subr.bf16.mxu0 0
      %648 = vmatpush1.bf16.msra.mxu0 0
      %649 = vmatprep.subr.bf16.mxu0 0
      %650 = vmatpush1.bf16.msra.mxu0 0
      %651 = vmatprep.subr.bf16.mxu0 0
      %652 = vmatpush1.bf16.msra.mxu0 0
      %653 = vmatprep.subr.bf16.mxu0 0
      %654 = vmatpush1.bf16.msra.mxu0 0
      %655 = vmatprep.subr.bf16.mxu0 0
      %656 = vmatpush1.bf16.msra.mxu0 0
      %657 = vmatprep.subr.bf16.mxu0 0
      %658 = vmatpush1.bf16.msra.mxu0 0
      %659 = vmatprep.subr.bf16.mxu0 0
      %660 = vmatpush1.bf16.msra.mxu0 0
      %661 = vmatprep.subr.bf16.mxu0 0
      %662 = vmatpush1.bf16.msra.mxu0 0
      %663 = vmatprep.subr.bf16.mxu0 0
      %664 = vmatpush1.bf16.msra.mxu0 0
      %665 = vmatprep.subr.bf16.mxu0 0
      %666 = vmatpush1.bf16.msra.mxu0 0
      %667 = vmatprep.mubr.bf16.mxu0 0
      %668 = vmatmul.mubr.bf16.gmra.mrb[0].mxu0 %v340
      %v669 = vpop.f32.mrb[0].mxu0
      %v670 = vadd.f32 %v320, %v669
      %v671 = vpop.f32.mrb[0].mxu0
      %v672 = vpop.f32.mrb[0].mxu0
      %v673 = vadd.f32 %v325, %v672
      %v674 = vpop.f32.mrb[0].mxu0
      %675 = vdwg.mxu0
      %v676 = vmax.f32 %v670, 0.0
      %v677 = vmax.f32 %v673, 0.0
      %v678 = vpack.c.bf16 %v677, %v676
      %679 = vmatprep.subr.bf16.mxu0 0
      %680 = vmatpush1.bf16.msra.mxu0 %v678
      %681 = vmatprep.subr.bf16.mxu0 0
      %682 = vmatpush1.bf16.msra.mxu0 0
      %683 = vmatprep.subr.bf16.mxu0 0
      %684 = vmatpush1.bf16.msra.mxu0 0
      %685 = vmatprep.subr.bf16.mxu0 0
      %686 = vmatpush1.bf16.msra.mxu0 0
      %687 = vmatprep.subr.bf16.mxu0 0
      %688 = vmatpush1.bf16.msra.mxu0 0
      %689 = vmatprep.subr.bf16.mxu0 0
      %690 = vmatpush1.bf16.msra.mxu0 0
      %691 = vmatprep.subr.bf16.mxu0 0
      %692 = vmatpush1.bf16.msra.mxu0 0
      %693 = vmatprep.subr.bf16.mxu0 0
      %694 = vmatpush1.bf16.msra.mxu0 0
      %695 = vmatprep.subr.bf16.mxu0 0
      %696 = vmatpush1.bf16.msra.mxu0 0
      %697 = vmatprep.subr.bf16.mxu0 0
      %698 = vmatpush1.bf16.msra.mxu0 0
      %699 = vmatprep.subr.bf16.mxu0 0
      %700 = vmatpush1.bf16.msra.mxu0 0
      %701 = vmatprep.subr.bf16.mxu0 0
      %702 = vmatpush1.bf16.msra.mxu0 0
      %703 = vmatprep.subr.bf16.mxu0 0
      %704 = vmatpush1.bf16.msra.mxu0 0
      %705 = vmatprep.subr.bf16.mxu0 0
      %706 = vmatpush1.bf16.msra.mxu0 0
      %707 = vmatprep.subr.bf16.mxu0 0
      %708 = vmatpush1.bf16.msra.mxu0 0
      %709 = vmatprep.subr.bf16.mxu0 0
      %710 = vmatpush1.bf16.msra.mxu0 0
      %711 = vmatprep.mubr.bf16.mxu0 0
      %712 = vmatmul.mubr.bf16.gmra.mrb[0].mxu0 %v417
      %v713 = vpop.f32.mrb[0].mxu0
      %v714 = vadd.f32 %v389, %v713
      %v715 = vpop.f32.mrb[0].mxu0
      %v716 = vpop.f32.mrb[0].mxu0
      %v717 = vadd.f32 %v394, %v716
      %v718 = vpop.f32.mrb[0].mxu0
      %719 = vmatprep.mubr.bf16.mxu0 0
      %720 = vmatmul.mubr.bf16.gmra.mrb[0].mxu0 %v420
      %v721 = vpop.f32.mrb[0].mxu0
      %v722 = vadd.f32 %v399, %v721
      %v723 = vpop.f32.mrb[0].mxu0
      %v724 = vpop.f32.mrb[0].mxu0
      %v725 = vadd.f32 %v404, %v724
      %v726 = vpop.f32.mrb[0].mxu0
      %727 = vdwg.mxu0
      %v728 = vmax.f32 %v714, 0.0
      %v729 = vmax.f32 %v717, 0.0
      %v730 = vmax.f32 %v722, 0.0
      %v731 = vmax.f32 %v725, 0.0
      %v732 = vpack.c.bf16 %v729, %v728
      %v733 = vpack.c.bf16 %v731, %v730
      %v736 = vunpack.c.l.b16 %v732
      %v737 = vunpack.c.h.b16 %v732
      %v738 = vunpack.c.l.b16 %v733
      %v739 = vunpack.c.h.b16 %v733
      %v740 = vpack.c.b16 %v736, %v736
      %v741 = vpack.c.b16 %v737, %v737
      %v742 = vpack.c.b16 %v738, %v738
      %v743 = vpack.c.b16 %v739, %v739
      %s748 = scalar_lea.vmem %s296, 32
      %749 = vst [vmem:[%s748] sm:$0xf] %v740
      %750 = vst [vmem:[%s748 + $0x4] sm:$0xf] %v741
      %751 = vst [vmem:[%s748 + $0x8] sm:$0xf] %v742
      %752 = vst [vmem:[%s748 + $0xc] sm:$0xf] %v743
      %v753 = vmax.f32 %v622, %v728
      %v754 = vmax.f32 %v623, %v729
      %v755 = vmax.f32 %v624, %v730
      %v756 = vmax.f32 %v625, %v731
      %s757 = scalar_lea.vmem %s286, 24
      %v758 = vld [vmem:[%s757] sm:$0xf]
      %v759 = vld [vmem:[%s757 + $0x4] sm:$0xf]
      %v762 = vunpack.c.l.b16 %v758
      %v763 = vunpack.c.l.b16 %v759
      %v764 = vpack.c.b16 %v763, %v762
      %766 = vmatprep.subr.bf16.mxu0 0
      %767 = vmatpush1.bf16.msra.mxu0 %v764
      %768 = vmatprep.subr.bf16.mxu0 0
      %769 = vmatpush1.bf16.msra.mxu0 0
      %770 = vmatprep.subr.bf16.mxu0 0
      %771 = vmatpush1.bf16.msra.mxu0 0
      %772 = vmatprep.subr.bf16.mxu0 0
      %773 = vmatpush1.bf16.msra.mxu0 0
      %774 = vmatprep.subr.bf16.mxu0 0
      %775 = vmatpush1.bf16.msra.mxu0 0
      %776 = vmatprep.subr.bf16.mxu0 0
      %777 = vmatpush1.bf16.msra.mxu0 0
      %778 = vmatprep.subr.bf16.mxu0 0
      %779 = vmatpush1.bf16.msra.mxu0 0
      %780 = vmatprep.subr.bf16.mxu0 0
      %781 = vmatpush1.bf16.msra.mxu0 0
      %782 = vmatprep.subr.bf16.mxu0 0
      %783 = vmatpush1.bf16.msra.mxu0 0
      %784 = vmatprep.subr.bf16.mxu0 0
      %785 = vmatpush1.bf16.msra.mxu0 0
      %786 = vmatprep.subr.bf16.mxu0 0
      %787 = vmatpush1.bf16.msra.mxu0 0
      %788 = vmatprep.subr.bf16.mxu0 0
      %789 = vmatpush1.bf16.msra.mxu0 0
      %790 = vmatprep.subr.bf16.mxu0 0
      %791 = vmatpush1.bf16.msra.mxu0 0
      %792 = vmatprep.subr.bf16.mxu0 0
      %793 = vmatpush1.bf16.msra.mxu0 0
      %794 = vmatprep.subr.bf16.mxu0 0
      %795 = vmatpush1.bf16.msra.mxu0 0
      %796 = vmatprep.subr.bf16.mxu0 0
      %797 = vmatpush1.bf16.msra.mxu0 0
      %798 = vmatprep.mubr.bf16.mxu0 0
      %799 = vmatmul.mubr.bf16.gmra.mrb[0].mxu0 %v340
      %v800 = vpop.f32.mrb[0].mxu0
      %v801 = vadd.f32 %v320, %v800
      %v802 = vpop.f32.mrb[0].mxu0
      %v803 = vpop.f32.mrb[0].mxu0
      %v804 = vadd.f32 %v325, %v803
      %v805 = vpop.f32.mrb[0].mxu0
      %806 = vdwg.mxu0
      %v807 = vmax.f32 %v801, 0.0
      %v808 = vmax.f32 %v804, 0.0
      %v809 = vpack.c.bf16 %v808, %v807
      %810 = vmatprep.subr.bf16.mxu0 0
      %811 = vmatpush1.bf16.msra.mxu0 %v809
      %812 = vmatprep.subr.bf16.mxu0 0
      %813 = vmatpush1.bf16.msra.mxu0 0
      %814 = vmatprep.subr.bf16.mxu0 0
      %815 = vmatpush1.bf16.msra.mxu0 0
      %816 = vmatprep.subr.bf16.mxu0 0
      %817 = vmatpush1.bf16.msra.mxu0 0
      %818 = vmatprep.subr.bf16.mxu0 0
      %819 = vmatpush1.bf16.msra.mxu0 0
      %820 = vmatprep.subr.bf16.mxu0 0
      %821 = vmatpush1.bf16.msra.mxu0 0
      %822 = vmatprep.subr.bf16.mxu0 0
      %823 = vmatpush1.bf16.msra.mxu0 0
      %824 = vmatprep.subr.bf16.mxu0 0
      %825 = vmatpush1.bf16.msra.mxu0 0
      %826 = vmatprep.subr.bf16.mxu0 0
      %827 = vmatpush1.bf16.msra.mxu0 0
      %828 = vmatprep.subr.bf16.mxu0 0
      %829 = vmatpush1.bf16.msra.mxu0 0
      %830 = vmatprep.subr.bf16.mxu0 0
      %831 = vmatpush1.bf16.msra.mxu0 0
      %832 = vmatprep.subr.bf16.mxu0 0
      %833 = vmatpush1.bf16.msra.mxu0 0
      %834 = vmatprep.subr.bf16.mxu0 0
      %835 = vmatpush1.bf16.msra.mxu0 0
      %836 = vmatprep.subr.bf16.mxu0 0
      %837 = vmatpush1.bf16.msra.mxu0 0
      %838 = vmatprep.subr.bf16.mxu0 0
      %839 = vmatpush1.bf16.msra.mxu0 0
      %840 = vmatprep.subr.bf16.mxu0 0
      %841 = vmatpush1.bf16.msra.mxu0 0
      %842 = vmatprep.mubr.bf16.mxu0 0
      %843 = vmatmul.mubr.bf16.gmra.mrb[0].mxu0 %v417
      %v844 = vpop.f32.mrb[0].mxu0
      %v845 = vadd.f32 %v389, %v844
      %v846 = vpop.f32.mrb[0].mxu0
      %v847 = vpop.f32.mrb[0].mxu0
      %v848 = vadd.f32 %v394, %v847
      %v849 = vpop.f32.mrb[0].mxu0
      %850 = vmatprep.mubr.bf16.mxu0 0
      %851 = vmatmul.mubr.bf16.gmra.mrb[0].mxu0 %v420
      %v852 = vpop.f32.mrb[0].mxu0
      %v853 = vadd.f32 %v399, %v852
      %v854 = vpop.f32.mrb[0].mxu0
      %v855 = vpop.f32.mrb[0].mxu0
      %v856 = vadd.f32 %v404, %v855
      %v857 = vpop.f32.mrb[0].mxu0
      %858 = vdwg.mxu0
      %v859 = vmax.f32 %v845, 0.0
      %v860 = vmax.f32 %v848, 0.0
      %v861 = vmax.f32 %v853, 0.0
      %v862 = vmax.f32 %v856, 0.0
      %v863 = vpack.c.bf16 %v860, %v859
      %v864 = vpack.c.bf16 %v862, %v861
      %v867 = vunpack.c.l.b16 %v863
      %v868 = vunpack.c.h.b16 %v863
      %v869 = vunpack.c.l.b16 %v864
      %v870 = vunpack.c.h.b16 %v864
      %v871 = vpack.c.b16 %v867, %v867
      %v872 = vpack.c.b16 %v868, %v868
      %v873 = vpack.c.b16 %v869, %v869
      %v874 = vpack.c.b16 %v870, %v870
      %s879 = scalar_lea.vmem %s296, 48
      %880 = vst [vmem:[%s879] sm:$0xf] %v871
      %881 = vst [vmem:[%s879 + $0x4] sm:$0xf] %v872
      %882 = vst [vmem:[%s879 + $0x8] sm:$0xf] %v873
      %883 = vst [vmem:[%s879 + $0xc] sm:$0xf] %v874
      %v884 = vmax.f32 %v753, %v859
      %v885 = vmax.f32 %v754, %v860
      %v886 = vmax.f32 %v755, %v861
      %v887 = vmax.f32 %v756, %v862
      %p888 = scmp.eq.s32.totalorder %s23, 0
      // Predicated region
      $region41: #{a_call__.3} parent=39 // pred_check
        %p889 = pneg %p888
      $region42: #{a_call__.3} parent=39 // pred_check_branch
        %891 = sbr.rel (%p889) target = $region44
      $region43: #{a_call__.3} parent=39 // pred_region
        %892 = vst [vmem:[%s301] sm:$0xff] %v884
        %893 = vst [vmem:[%s301 + $0x8] sm:$0xff] %v885
        %894 = vst [vmem:[%s301 + $0x10] sm:$0xff] %v886
        %895 = vst [vmem:[%s301 + $0x18] sm:$0xff] %v887
      $region44: #{a_call__.3} parent=39 // pred_fallthru
        _
      %p896 = scmp.ne.s32.totalorder %s23, 0
      // Predicated region
      $region45: #{a_call__.3} parent=39 // pred_check
        %p897 = pneg %p896
      $region46: #{a_call__.3} parent=39 // pred_check_branch
        %899 = sbr.rel (%p897) target = $region48
      $region47: #{a_call__.3} parent=39 // pred_region
        %v900 = vld [vmem:[%s301] sm:$0xff]
        %v901 = vld [vmem:[%s301 + $0x8] sm:$0xff]
        %v902 = vld [vmem:[%s301 + $0x10] sm:$0xff]
        %v903 = vld [vmem:[%s301 + $0x18] sm:$0xff]
        %v904 = vmax.f32 %v900, %v884
        %v905 = vmax.f32 %v901, %v885
        %v906 = vmax.f32 %v902, %v886
        %v907 = vmax.f32 %v903, %v887
        %908 = vst [vmem:[%s301] sm:$0xff] %v904
        %909 = vst [vmem:[%s301 + $0x8] sm:$0xff] %v905
        %910 = vst [vmem:[%s301 + $0x10] sm:$0xff] %v906
        %911 = vst [vmem:[%s301 + $0x18] sm:$0xff] %v907
      $region48: #{a_call__.3} parent=39 // pred_fallthru
        _
      %s912 = smul.u32 4, %s23
      %p913 = scmp.lt.s32.totalorder %s912, 7
      %s914 = scalar_select %p913, %s912, 7
      %p915 = scmp.lt.s32.totalorder %s22, 0
      %s916 = scalar_select %p915, %s22, 0
      %s917 = smul.addr %s914, 4
      %s918 = sadd.s32 %s916, %s917
      %s919 = smul.addr %s918, 4
      %s920 = scalar_lea.vmem %s5, %s919
      %p921 = scmp.lt.s32.totalorder %s22, 0
      %s922 = scalar_select %p921, %s22, 0
      %s923 = smul.addr %s922, 8
      %s924 = scalar_lea.vmem %s6, %s923
      // Predicated region
      $region49: #{a_call__.3} parent=39 // pred_check
        %p925 = pneg %p162
      $region50: #{a_call__.3} parent=39 // pred_check_branch
        %927 = sbr.rel (%p925) target = $region52
      $region51: #{a_call__.3} parent=39 // pred_region
        %s928 = smul.u32 4, %s23
      $region52: #{a_call__.3} parent=39 // pred_fallthru
        _
      // Predicated region
      $region53: #{a_call__.3} parent=39 // pred_check
        %p929 = pneg %p188
      $region54: #{a_call__.3} parent=39 // pred_check_branch
        %931 = sbr.rel (%p929) target = $region56
      $region55: #{a_call__.3} parent=39 // pred_region
        _
      $region56: #{a_call__.3} parent=39 // pred_fallthru
        _
      // Predicated region
      $region57: #{a_call__.3} parent=39 // pred_check
        %p932 = pneg %p188
      $region58: #{a_call__.3} parent=39 // pred_check_branch
        %934 = sbr.rel (%p932) target = $region60
      $region59: #{a_call__.3} parent=39 // pred_region
        %p935 = scmp.lt.s32.totalorder %s22, 0
        %s936 = scalar_select %p935, %s22, 0
        %s937 = smul.addr %s936, 8
        %s938 = scalar_lea.vmem %s6, %s937
      $region60: #{a_call__.3} parent=39 // pred_fallthru
        _
    $region40: #{a_call__.3} parent=5 // pred_fallthru
      _
    %p939 = scmp.le.s32.totalorder 2, %s13
    // Predicated region
    $region61: #{a_call__.3} parent=5 // pred_check
      %p940 = pneg %p939
    $region62: #{a_call__.3} parent=5 // pred_check_branch
      %942 = sbr.rel (%p940) target = $region64
    $region63: #{a_call__.3} parent=5 // pred_region
      %s943 = ssub.s32 %s13, 2
      // Predicated region
      $region65: #{a_call__.3} parent=63 // pred_check
        %p944 = pneg %p168
      $region66: #{a_call__.3} parent=63 // pred_check_branch
        %946 = sbr.rel (%p944) target = $region68
      $region67: #{a_call__.3} parent=63 // pred_region
        %s947 = smul.u32 4, %s25
        %p948 = scmp.lt.s32.totalorder %s947, 7
        %s949 = scalar_select %p948, %s947, 7
        %p950 = scmp.lt.s32.totalorder %s24, 0
        %s951 = scalar_select %p950, %s24, 0
        %s952 = smul.addr %s949, 4
        %s953 = sadd.s32 %s951, %s952
        %s954 = smul.addr %s953, 4
        %s955 = scalar_lea.vmem %s5, %s954
      $region68: #{a_call__.3} parent=63 // pred_fallthru
        _
    $region64: #{a_call__.3} parent=5 // pred_fallthru
      _
  $region6: #{a_call__.3} parent=0 // loop_footer
    %s17 = sadd.s32 1, %s13
  $region7: #{a_call__.3} parent=0 // loop_footer_branch
    %12 = sbr.rel target = $region3
  $region8: #{a_call__.3} parent=0 // loop_exit
    _

</llo_original>
